<compile_context>
chip_gen: v7x
topology: tpu7x:2x2x1
jax: 0.10.0
libtpu: 0.0.40
codegen_flags: <defaults>
</compile_context>

<pallas_src>
import functools

import jax
import jax.numpy as jnp
from jax import lax
from jax.experimental import pallas as pl
from jax.experimental.pallas import tpu as pltpu


# ----------------------------------------------------------------------------
# Kernel 1: LSTM recurrence, chunked over seq
# ----------------------------------------------------------------------------
def _lstm_recurrence_kernel(emb_ref, wih_ref, whh_ref, bias_ref,
                            hseq_ref, h_out_ref, c_out_ref,
                            h_scr, c_scr, xproj_scr,
                            *, hidden_dim, chunk, bs_pad, unroll):
    """emb_ref  : (chunk, bs_pad, E)  bf16 time-major embeddings (batch padded)
       wih_ref  : (E, 4H)             bf16 weight_ih (g-gate columns x2)
       whh_ref  : (H, 4H)             bf16 weight_hh (g-gate columns x2)
       bias_ref : (1, 4H)             f32  bias       (g-gate entries x2)
       hseq_ref : (chunk, bs_pad, H)  bf16 hidden-sequence chunk (output)
       h_out_ref: (bs_pad, H)         f32  final h_t (resident, written/chunk)
       c_out_ref: (bs_pad, H)         f32  final c_t
       h_scr,c_scr : (bs_pad, H) f32  recurrence carry, persists across grid
       xproj_scr: (chunk, bs_pad, 4H) bf16 hoisted input projection
    """
    H = hidden_dim
    E = emb_ref.shape[-1]

    @pl.when(pl.program_id(0) == 0)
    def _init():
        h_scr[...] = jnp.zeros_like(h_scr)
        c_scr[...] = jnp.zeros_like(c_scr)

    # Hoisted non-recurrent input projection for this chunk: one dense
    # (chunk*bs_pad, E) x (E, 4H) bf16 MXU matmul with f32 accumulation,
    # instead of `chunk` tiny matmuls on the serial critical path.
    x_flat = emb_ref[...].reshape(chunk * bs_pad, E)
    xproj = jnp.dot(x_flat, wih_ref[...],
                    preferred_element_type=jnp.float32) + bias_ref[...]
    xproj_scr[...] = xproj.reshape(chunk, bs_pad, 4 * H).astype(jnp.bfloat16)

    def step(t, carry):
        h, c = carry
        # Only the recurrent bf16 matmul remains inside the serial loop.
        gates = xproj_scr[t].astype(jnp.float32) + jnp.dot(
            h.astype(jnp.bfloat16), whh_ref[...],
            preferred_element_type=jnp.float32)
        # Single full-width sigmoid over all four gates (one EUP pass even when
        # H < 128); the g-gate weights/bias were pre-scaled by 2 so
        # tanh(z) = 2*sigmoid(2z) - 1 is a cheap VPU fixup.
        s = jax.nn.sigmoid(gates)
        i_t = s[:, 0 * H:1 * H]
        f_t = s[:, 1 * H:2 * H]
        g_t = 2.0 * s[:, 2 * H:3 * H] - 1.0
        o_t = s[:, 3 * H:4 * H]
        c = f_t * c + i_t * g_t
        h = o_t * jnp.tanh(c)
        hseq_ref[t] = h.astype(hseq_ref.dtype)   # dense (8 x H) store, bf16
        return (h, c)

    h0 = h_scr[...]
    c0 = c_scr[...]
    # Capped unroll: enough ILP to overlap MXU pops / EUP / VPU across steps
    # without blowing past 64 vregs on long chunks.
    h_fin, c_fin = lax.fori_loop(0, chunk, step, (h0, c0), unroll=unroll)
    h_scr[...] = h_fin
    c_scr[...] = c_fin
    # Block index is constant -> resident output, written back once at the end.
    h_out_ref[...] = h_fin
    c_out_ref[...] = c_fin


# ----------------------------------------------------------------------------
# Kernel 2: Linear + ReLU + legacy LogSoftmax, writes (batch, seq, vocab)
# ----------------------------------------------------------------------------
def _proj_logsoftmax_kernel(hseq_ref, wlin_ref, blin_ref, out_ref,
                            *, bs, bs_pad, ts, softmax_over_batch):
    """hseq_ref : (bs_pad, ts, H)   bf16 hidden-state tile (batch-major)
       wlin_ref : (H, tv)           bf16 linear weight tile
       blin_ref : (1, tv)           f32  linear bias tile
       out_ref  : (bs_pad, ts, tv)  f32  log-softmax output tile
    """
    tv = out_ref.shape[-1]
    H = hseq_ref.shape[-1]

    # One dense 2-D bf16 matmul (f32 accumulation); rows are already ordered
    # (batch, time) so the result is stored directly in the final layout.
    hs = hseq_ref[...].reshape(bs_pad * ts, H)
    lin = jnp.dot(hs, wlin_ref[...], preferred_element_type=jnp.float32)
    act = jnp.maximum(lin + blin_ref[...], 0.0).reshape(bs_pad, ts, tv)

    if softmax_over_batch:
        # legacy nn.LogSoftmax() on 3-D (batch, seq, vocab) -> dim=0 (batch).
        # Padded batch rows are excluded with a STATIC leading-dim slice
        # (no iota / mask, no transient exp on padded rows); when bs == bs_pad
        # the slice is the full tensor and costs nothing.
        m = jnp.max(act[:bs], axis=0, keepdims=True)
        shifted = act - m
        denom = jnp.sum(jnp.exp(shifted[:bs]), axis=0, keepdims=True)
        out_ref[...] = shifted - jnp.log(denom)
    else:
        # seq == 1 branch: 2-D (batch, vocab) output -> dim=1 (vocab).
        # TODO(synk): for very large vocabularies this full-vocab block should
        # become an online (running max / running sum) softmax over a vocab
        # grid axis; the demo vocab fits comfortably in one block.
        m = jnp.max(act, axis=2, keepdims=True)
        shifted = act - m
        out_ref[...] = shifted - jnp.log(
            jnp.sum(jnp.exp(shifted), axis=2, keepdims=True))


# ----------------------------------------------------------------------------
# Tiling / config helpers
# ----------------------------------------------------------------------------
def _pick_time_tile(seq, target, align=1):
    """Largest divisor of `seq` <= target that is a multiple of `align`
    (or the full extent).  align=8 keeps second-to-last block dims legal."""
    if seq <= target:
        return seq
    for d in range(target, 0, -1):
        if seq % d == 0 and (d % align == 0 or d == seq):
            return d
    return seq  # full-extent block (always legal)


def _pick_vocab_tile(vocab, target_lanes=1024):
    if vocab % 128:
        return vocab                       # full-dim block (allowed by rule)
    blocks = vocab // 128
    tb = min(blocks, max(1, target_lanes // 128))
    while blocks % tb:
        tb -= 1
    return tb * 128


def _vmem_limit_bytes():
    """~3/4 of the chip's VMEM (64 MiB v7x, 128 MiB v5e/v6e), with a safe
    fallback if the query is unavailable."""
    cap = None
    try:
        cap = pltpu.get_tpu_info().vmem_capacity_bytes
    except Exception:
        cap = None
    if not cap:
        cap = 64 * 1024 * 1024
    return min((int(cap) * 3) // 4, 100 * 1024 * 1024)


# ----------------------------------------------------------------------------
# Wrapper
# ----------------------------------------------------------------------------
def lstm_torch_forward(params, token_ids):
    emb_table, wih, whh, bias, wlin, blin = params
    bs, seq = token_ids.shape
    V, E = emb_table.shape
    H = whh.shape[0]
    BS_PAD = max(8, ((bs + 7) // 8) * 8)      # pad batch to full sublanes

    # bf16 MXU operands.  The g-gate columns are pre-scaled by 2 (exact in
    # bf16) so the kernel can use one full-width sigmoid for all four gates.
    gscale = jnp.ones((4 * H,), jnp.float32).at[2 * H:3 * H].set(2.0)
    wih_bf = (wih * gscale).astype(jnp.bfloat16)
    whh_bf = (whh * gscale).astype(jnp.bfloat16)
    bias_s = (bias * gscale).reshape(1, 4 * H)            # stays f32
    wlin_bf = wlin.astype(jnp.bfloat16)

    # Glue: embedding gather + time-major transpose + batch pad (bf16 halves
    # the kernel-1 input bandwidth; the matmul operands are bf16 anyway).
    # TODO(synk): fuse the row gather into kernel 1 (scalar-prefetched ids +
    # pl.Element index_map) to drop this extra XLA HBM pass.
    embeds = emb_table[token_ids].astype(jnp.bfloat16)     # (bs, seq, E)
    embeds_tm = jnp.transpose(embeds, (1, 0, 2))           # (seq, bs, E)
    if BS_PAD != bs:
        embeds_tm = jnp.pad(embeds_tm, ((0, 0), (0, BS_PAD - bs), (0, 0)))

    vmem_limit = _vmem_limit_bytes()

    # ---- kernel 1: recurrence, chunked over seq -------------------------------
    chunk = _pick_time_tile(seq, target=32)                # VMEM is O(chunk)
    n_chunks = seq // chunk

    hseq, h_pad, c_pad = pl.pallas_call(
        functools.partial(_lstm_recurrence_kernel, hidden_dim=H, chunk=chunk,
                          bs_pad=BS_PAD, unroll=max(1, min(8, chunk))),
        out_shape=(
            jax.ShapeDtypeStruct((seq, BS_PAD, H), jnp.bfloat16),
            jax.ShapeDtypeStruct((BS_PAD, H), jnp.float32),
            jax.ShapeDtypeStruct((BS_PAD, H), jnp.float32),
        ),
        grid=(n_chunks,),
        in_specs=[
            pl.BlockSpec((chunk, BS_PAD, E), lambda i: (i, 0, 0)),
            pl.BlockSpec((E, 4 * H), lambda i: (0, 0)),
            pl.BlockSpec((H, 4 * H), lambda i: (0, 0)),
            pl.BlockSpec((1, 4 * H), lambda i: (0, 0)),
        ],
        out_specs=(
            pl.BlockSpec((chunk, BS_PAD, H), lambda i: (i, 0, 0)),
            pl.BlockSpec((BS_PAD, H), lambda i: (0, 0)),
            pl.BlockSpec((BS_PAD, H), lambda i: (0, 0)),
        ),
        scratch_shapes=[
            pltpu.VMEM((BS_PAD, H), jnp.float32),                 # h carry
            pltpu.VMEM((BS_PAD, H), jnp.float32),                 # c carry
            pltpu.VMEM((chunk, BS_PAD, 4 * H), jnp.bfloat16),     # xproj
        ],
        compiler_params=pltpu.CompilerParams(
            dimension_semantics=("arbitrary",),          # serial recurrence
            vmem_limit_bytes=vmem_limit),
        cost_estimate=pl.CostEstimate(
            flops=2 * seq * BS_PAD * (E + H) * 4 * H,
            transcendentals=5 * seq * BS_PAD * H,
            bytes_accessed=2 * seq * BS_PAD * (E + H)
                           + 2 * (E + H) * 4 * H + 4 * 4 * H
                           + 2 * 4 * BS_PAD * H),
    )(embeds_tm, wih_bf, whh_bf, bias_s)

    # Small bf16 relayout so kernel 2 can emit the final (batch, seq, vocab)
    # layout directly; this replaces the previous full-size f32 output
    # transpose (traffic reduced by ~V/H x).
    hseq_bt = jnp.transpose(hseq, (1, 0, 2))               # (BS_PAD, seq, H)

    # ---- kernel 2: projection + ReLU + log-softmax -----------------------------
    softmax_over_batch = (seq != 1)      # legacy LogSoftmax dim rule (3-D vs 2-D)
    ts = _pick_time_tile(seq, target=32, align=8)          # ts*BS_PAD = 256 rows
    tv = _pick_vocab_tile(V) if softmax_over_batch else V
    n_s, n_v = seq // ts, V // tv

    out_bt = pl.pallas_call(
        functools.partial(_proj_logsoftmax_kernel, bs=bs, bs_pad=BS_PAD,
                          ts=ts, softmax_over_batch=softmax_over_batch),
        out_shape=jax.ShapeDtypeStruct((BS_PAD, seq, V), jnp.float32),
        grid=(n_s, n_v),
        in_specs=[
            pl.BlockSpec((BS_PAD, ts, H), lambda si, vi: (0, si, 0)),
            pl.BlockSpec((H, tv), lambda si, vi: (0, vi)),
            pl.BlockSpec((1, tv), lambda si, vi: (0, vi)),
        ],
        out_specs=pl.BlockSpec((BS_PAD, ts, tv), lambda si, vi: (0, si, vi)),
        compiler_params=pltpu.CompilerParams(
            dimension_semantics=("parallel", "parallel"),
            vmem_limit_bytes=vmem_limit),
        cost_estimate=pl.CostEstimate(
            flops=2 * seq * BS_PAD * H * V,
            transcendentals=seq * BS_PAD * V,
            bytes_accessed=2 * seq * BS_PAD * H + 2 * H * V + 4 * V
                           + 4 * seq * BS_PAD * V),
    )(hseq_bt, wlin_bf, blin.reshape(1, V))

    # Drop batch padding; output is already in the PyTorch (batch, seq, vocab)
    # convention — no full-size transpose needed.
    output = out_bt[:bs]                                   # (bs, seq, V)
    h_t = h_pad[:bs]
    c_t = c_pad[:bs]

    if seq == 1:
        # torch: output[:, 0, :] (bs, V) -> log_softmax(dim=1) -> view(1, 1, -1)
        # which is (1, 1, bs*V) — reproduced exactly (also for bs > 1).
        output = output[:, 0, :].reshape(1, 1, bs * V)
    return output, (h_t, c_t)


# ----------------------------------------------------------------------------
# Parameter init (matches init_weights(): xavier_uniform_ for >=2-D, zeros 1-D)
# ----------------------------------------------------------------------------
def _xavier_uniform(key, shape):
    fan_in, fan_out = shape
    a = (6.0 / (fan_in + fan_out)) ** 0.5
    return jax.random.uniform(key, shape, jnp.float32, -a, a)


def init_params(key, vocab_size, embedding_dim, hidden_dim):
    k1, k2, k3, k4 = jax.random.split(key, 4)
    emb_table = _xavier_uniform(k1, (vocab_size, embedding_dim))
    wih = _xavier_uniform(k2, (embedding_dim, 4 * hidden_dim))
    whh = _xavier_uniform(k3, (hidden_dim, 4 * hidden_dim))
    bias = jnp.zeros((4 * hidden_dim,), jnp.float32)
    wlin = _xavier_uniform(k4, (hidden_dim, vocab_size))   # torch stores (V,H); we keep (H,V)
    blin = jnp.zeros((vocab_size,), jnp.float32)
    return (emb_table, wih, whh, bias, wlin, blin)


if __name__ == "__main__":
    vocab_size, embedding_dim, hidden_dim = 128, 16, 32
    batch, seq = 2, 8

    key = jax.random.PRNGKey(0)
    pkey, dkey = jax.random.split(key)
    params = init_params(pkey, vocab_size, embedding_dim, hidden_dim)
    token_ids = jax.random.randint(dkey, (batch, seq), 0, vocab_size,
                                   dtype=jnp.int32)

    output, (h_t, c_t) = jax.jit(lstm_torch_forward)(params, token_ids)
    jax.block_until_ready((output, h_t, c_t))

    assert output.shape == (batch, seq, vocab_size)
    assert h_t.shape == (batch, hidden_dim) and c_t.shape == (batch, hidden_dim)
    print("KERNEL_OK")
</pallas_src>

<mosaic_0001>
module attributes {stable_mosaic.version = 11 : i64} {
  func.func @_proj_logsoftmax_kernel(%arg0: i32, %arg1: i32, %arg2: memref<8x8x32xbf16, #tpu.memory_space<vmem>>, %arg3: memref<32x128xbf16, #tpu.memory_space<vmem>>, %arg4: memref<1x128xf32, #tpu.memory_space<vmem>>, %arg5: memref<8x8x128xf32, #tpu.memory_space<vmem>>) attributes {dimension_semantics = [#tpu.dimension_semantics<parallel>, #tpu.dimension_semantics<parallel>], iteration_bounds = array<i64: 1, 1>, scalar_prefetch = 0 : i64, scratch_operands = 0 : i64, tpu.core_type = #tpu.core_type<tc>, window_params = [{transform_indices = @transform_0, window_bounds = array<i64: 8, 8, 32>}, {transform_indices = @transform_1, window_bounds = array<i64: 32, 128>}, {transform_indices = @transform_2, window_bounds = array<i64: 1, 128>}, {transform_indices = @transform_3, window_bounds = array<i64: 8, 8, 128>}]} {
    %c0 = arith.constant 0 : index
    %c0_0 = arith.constant 0 : index
    %c0_1 = arith.constant 0 : index
    %0 = vector.load %arg2[%c0, %c0_0, %c0_1] : memref<8x8x32xbf16, #tpu.memory_space<vmem>>, vector<8x8x32xbf16>
    %1 = vector.shape_cast %0 : vector<8x8x32xbf16> to vector<64x32xbf16>
    %c0_2 = arith.constant 0 : index
    %c0_3 = arith.constant 0 : index
    %2 = vector.load %arg3[%c0_2, %c0_3] : memref<32x128xbf16, #tpu.memory_space<vmem>>, vector<32x128xbf16>
    %cst = arith.constant dense<0.000000e+00> : vector<64x128xf32>
    %3 = tpu.matmul %1, %2, %cst {dimension_numbers = #tpu.dot_dimension_numbers<[1], [0], [0], [1], [0, 0, 1, 1], [], []>} : vector<64x32xbf16>, vector<32x128xbf16>, vector<64x128xf32> -> vector<64x128xf32>
    %c0_4 = arith.constant 0 : index
    %c0_5 = arith.constant 0 : index
    %4 = vector.load %arg4[%c0_4, %c0_5] : memref<1x128xf32, #tpu.memory_space<vmem>>, vector<1x128xf32>
    %5 = vector.broadcast %4 : vector<1x128xf32> to vector<64x128xf32>
    %6 = arith.addf %3, %5 : vector<64x128xf32>
    %cst_6 = arith.constant 0.000000e+00 : f32
    %7 = vector.broadcast %cst_6 : f32 to vector<64x128xf32>
    %8 = arith.maximumf %6, %7 : vector<64x128xf32>
    %9 = vector.shape_cast %8 : vector<64x128xf32> to vector<8x8x128xf32>
    %10 = vector.extract_strided_slice %9 {offsets = [0, 0, 0], sizes = [2, 8, 128], strides = [1, 1, 1]} : vector<8x8x128xf32> to vector<2x8x128xf32>
    %cst_7 = arith.constant dense<0xFF800000> : vector<8x128xf32>
    %11 = vector.multi_reduction <maximumf>, %10, %cst_7 [0] : vector<2x8x128xf32> to vector<8x128xf32>
    %12 = vector.shape_cast %11 : vector<8x128xf32> to vector<1x8x128xf32>
    %13 = vector.broadcast %12 : vector<1x8x128xf32> to vector<8x8x128xf32>
    %14 = arith.subf %9, %13 : vector<8x8x128xf32>
    %15 = vector.extract_strided_slice %14 {offsets = [0, 0, 0], sizes = [2, 8, 128], strides = [1, 1, 1]} : vector<8x8x128xf32> to vector<2x8x128xf32>
    %16 = math.exp %15 : vector<2x8x128xf32>
    %cst_8 = arith.constant dense<0.000000e+00> : vector<8x128xf32>
    %17 = vector.multi_reduction <add>, %16, %cst_8 [0] : vector<2x8x128xf32> to vector<8x128xf32>
    %18 = vector.shape_cast %17 : vector<8x128xf32> to vector<1x8x128xf32>
    %19 = math.log %18 : vector<1x8x128xf32>
    %20 = vector.broadcast %19 : vector<1x8x128xf32> to vector<8x8x128xf32>
    %21 = arith.subf %14, %20 : vector<8x8x128xf32>
    %c0_9 = arith.constant 0 : index
    %c0_10 = arith.constant 0 : index
    %c0_11 = arith.constant 0 : index
    %22 = vector.load %arg5[%c0_9, %c0_10, %c0_11] : memref<8x8x128xf32, #tpu.memory_space<vmem>>, vector<8x8x128xf32>
    tpu.vector_store %arg5[%c0_9, %c0_10, %c0_11], %21 {strides = array<i32>} : memref<8x8x128xf32, #tpu.memory_space<vmem>>, vector<8x8x128xf32>,
    return
  }
  func.func @transform_0(%arg0: i32, %arg1: i32) -> (i32, i32, i32) {
    %c0_i32 = arith.constant 0 : i32
    %c0_i32_0 = arith.constant 0 : i32
    %c0_i32_1 = arith.constant 0 : i32
    return %c0_i32, %arg0, %c0_i32_0 : i32, i32, i32
  }
  func.func @transform_1(%arg0: i32, %arg1: i32) -> (i32, i32) {
    %c0_i32 = arith.constant 0 : i32
    %c0_i32_0 = arith.constant 0 : i32
    return %c0_i32, %arg1 : i32, i32
  }
  func.func @transform_2(%arg0: i32, %arg1: i32) -> (i32, i32) {
    %c0_i32 = arith.constant 0 : i32
    %c0_i32_0 = arith.constant 0 : i32
    return %c0_i32, %arg1 : i32, i32
  }
  func.func @transform_3(%arg0: i32, %arg1: i32) -> (i32, i32, i32) {
    %c0_i32 = arith.constant 0 : i32
    %c0_i32_0 = arith.constant 0 : i32
    return %c0_i32, %arg0, %arg1 : i32, i32, i32
  }
}

module attributes {stable_mosaic.version = 11 : i64} {
  func.func @_lstm_recurrence_kernel(%arg0: i32, %arg1: memref<8x8x16xbf16, #tpu.memory_space<vmem>>, %arg2: memref<16x128xbf16, #tpu.memory_space<vmem>>, %arg3: memref<32x128xbf16, #tpu.memory_space<vmem>>, %arg4: memref<1x128xf32, #tpu.memory_space<vmem>>, %arg5: memref<8x8x32xbf16, #tpu.memory_space<vmem>>, %arg6: memref<8x32xf32, #tpu.memory_space<vmem>>, %arg7: memref<8x32xf32, #tpu.memory_space<vmem>>, %arg8: memref<8x32xf32, #tpu.memory_space<vmem>>, %arg9: memref<8x32xf32, #tpu.memory_space<vmem>>, %arg10: memref<8x8x128xbf16, #tpu.memory_space<vmem>>) attributes {dimension_semantics = [#tpu.dimension_semantics<arbitrary>], iteration_bounds = array<i64: 1>, scalar_prefetch = 0 : i64, scratch_operands = 3 : i64, tpu.core_type = #tpu.core_type<tc>, window_params = [{transform_indices = @transform_0, window_bounds = array<i64: 8, 8, 16>}, {pipeline_mode = #tpu.pipeline_mode<synchronous>, transform_indices = @transform_1, window_bounds = array<i64: 16, 128>}, {pipeline_mode = #tpu.pipeline_mode<synchronous>, transform_indices = @transform_2, window_bounds = array<i64: 32, 128>}, {pipeline_mode = #tpu.pipeline_mode<synchronous>, transform_indices = @transform_3, window_bounds = array<i64: 1, 128>}, {transform_indices = @transform_4, window_bounds = array<i64: 8, 8, 32>}, {pipeline_mode = #tpu.pipeline_mode<synchronous>, transform_indices = @transform_5, window_bounds = array<i64: 8, 32>}, {pipeline_mode = #tpu.pipeline_mode<synchronous>, transform_indices = @transform_6, window_bounds = array<i64: 8, 32>}]} {
    %c0_i32 = arith.constant 0 : i32
    %0 = arith.cmpi eq, %arg0, %c0_i32 : i32
    %1 = arith.extui %0 : i1 to i32
    %c0_i32_0 = arith.constant 0 : i32
    %2 = arith.cmpi ne, %1, %c0_i32_0 : i32
    scf.if %2 {
      %cst_103 = arith.constant 0.000000e+00 : f32
      %267 = vector.broadcast %cst_103 : f32 to vector<8x32xf32>
      %c0_104 = arith.constant 0 : index
      %c0_105 = arith.constant 0 : index
      %268 = vector.load %arg8[%c0_104, %c0_105] : memref<8x32xf32, #tpu.memory_space<vmem>>, vector<8x32xf32>
      tpu.vector_store %arg8[%c0_104, %c0_105], %267 {strides = array<i32>} : memref<8x32xf32, #tpu.memory_space<vmem>>, vector<8x32xf32>,
      %cst_106 = arith.constant 0.000000e+00 : f32
      %269 = vector.broadcast %cst_106 : f32 to vector<8x32xf32>
      %c0_107 = arith.constant 0 : index
      %c0_108 = arith.constant 0 : index
      %270 = vector.load %arg9[%c0_107, %c0_108] : memref<8x32xf32, #tpu.memory_space<vmem>>, vector<8x32xf32>
      tpu.vector_store %arg9[%c0_107, %c0_108], %269 {strides = array<i32>} : memref<8x32xf32, #tpu.memory_space<vmem>>, vector<8x32xf32>,
    } else {
    }
    %c0 = arith.constant 0 : index
    %c0_1 = arith.constant 0 : index
    %c0_2 = arith.constant 0 : index
    %3 = vector.load %arg1[%c0, %c0_1, %c0_2] : memref<8x8x16xbf16, #tpu.memory_space<vmem>>, vector<8x8x16xbf16>
    %4 = vector.shape_cast %3 : vector<8x8x16xbf16> to vector<64x16xbf16>
    %c0_3 = arith.constant 0 : index
    %c0_4 = arith.constant 0 : index
    %5 = vector.load %arg2[%c0_3, %c0_4] : memref<16x128xbf16, #tpu.memory_space<vmem>>, vector<16x128xbf16>
    %cst = arith.constant dense<0.000000e+00> : vector<64x128xf32>
    %6 = tpu.matmul %4, %5, %cst {dimension_numbers = #tpu.dot_dimension_numbers<[1], [0], [0], [1], [0, 0, 1, 1], [], []>} : vector<64x16xbf16>, vector<16x128xbf16>, vector<64x128xf32> -> vector<64x128xf32>
    %c0_5 = arith.constant 0 : index
    %c0_6 = arith.constant 0 : index
    %7 = vector.load %arg4[%c0_5, %c0_6] : memref<1x128xf32, #tpu.memory_space<vmem>>, vector<1x128xf32>
    %8 = vector.broadcast %7 : vector<1x128xf32> to vector<64x128xf32>
    %9 = arith.addf %6, %8 : vector<64x128xf32>
    %10 = vector.shape_cast %9 : vector<64x128xf32> to vector<8x8x128xf32>
    %11 = arith.truncf %10 : vector<8x8x128xf32> to vector<8x8x128xbf16>
    %c0_7 = arith.constant 0 : index
    %c0_8 = arith.constant 0 : index
    %c0_9 = arith.constant 0 : index
    %12 = vector.load %arg10[%c0_7, %c0_8, %c0_9] : memref<8x8x128xbf16, #tpu.memory_space<vmem>>, vector<8x8x128xbf16>
    tpu.vector_store %arg10[%c0_7, %c0_8, %c0_9], %11 {strides = array<i32>} : memref<8x8x128xbf16, #tpu.memory_space<vmem>>, vector<8x8x128xbf16>,
    %c0_10 = arith.constant 0 : index
    %c0_11 = arith.constant 0 : index
    %13 = vector.load %arg8[%c0_10, %c0_11] : memref<8x32xf32, #tpu.memory_space<vmem>>, vector<8x32xf32>
    %c0_12 = arith.constant 0 : index
    %c0_13 = arith.constant 0 : index
    %14 = vector.load %arg9[%c0_12, %c0_13] : memref<8x32xf32, #tpu.memory_space<vmem>>, vector<8x32xf32>
    %c0_i32_14 = arith.constant 0 : i32
    %15 = arith.index_cast %c0_i32_14 : i32 to index
    %c0_15 = arith.constant 0 : index
    %c0_16 = arith.constant 0 : index
    %16 = vector.load %arg10[%15, %c0_15, %c0_16] : memref<8x8x128xbf16, #tpu.memory_space<vmem>>, vector<1x8x128xbf16>
    %17 = vector.shape_cast %16 : vector<1x8x128xbf16> to vector<8x128xbf16>
    %18 = arith.extf %17 : vector<8x128xbf16> to vector<8x128xf32>
    %19 = arith.truncf %13 : vector<8x32xf32> to vector<8x32xbf16>
    %c0_17 = arith.constant 0 : index
    %c0_18 = arith.constant 0 : index
    %20 = vector.load %arg3[%c0_17, %c0_18] : memref<32x128xbf16, #tpu.memory_space<vmem>>, vector<32x128xbf16>
    %cst_19 = arith.constant dense<0.000000e+00> : vector<8x128xf32>
    %21 = tpu.matmul %19, %20, %cst_19 {dimension_numbers = #tpu.dot_dimension_numbers<[1], [0], [0], [1], [0, 0, 1, 1], [], []>} : vector<8x32xbf16>, vector<32x128xbf16>, vector<8x128xf32> -> vector<8x128xf32>
    %22 = arith.addf %18, %21 : vector<8x128xf32>
    %23 = arith.negf %22 : vector<8x128xf32>
    %24 = math.exp %23 : vector<8x128xf32>
    %cst_20 = arith.constant 1.000000e+00 : f32
    %25 = vector.broadcast %cst_20 : f32 to vector<8x128xf32>
    %26 = arith.addf %25, %24 : vector<8x128xf32>
    %27 = arith.divf %25, %26 : vector<8x128xf32>
    %28 = vector.extract_strided_slice %27 {offsets = [0, 0], sizes = [8, 32], strides = [1, 1]} : vector<8x128xf32> to vector<8x32xf32>
    %29 = vector.extract_strided_slice %27 {offsets = [0, 32], sizes = [8, 32], strides = [1, 1]} : vector<8x128xf32> to vector<8x32xf32>
    %30 = vector.extract_strided_slice %27 {offsets = [0, 64], sizes = [8, 32], strides = [1, 1]} : vector<8x128xf32> to vector<8x32xf32>
    %cst_21 = arith.constant 2.000000e+00 : f32
    %31 = vector.broadcast %cst_21 : f32 to vector<8x32xf32>
    %32 = arith.mulf %31, %30 : vector<8x32xf32>
    %cst_22 = arith.constant 1.000000e+00 : f32
    %33 = vector.broadcast %cst_22 : f32 to vector<8x32xf32>
    %34 = arith.subf %32, %33 : vector<8x32xf32>
    %35 = vector.extract_strided_slice %27 {offsets = [0, 96], sizes = [8, 32], strides = [1, 1]} : vector<8x128xf32> to vector<8x32xf32>
    %36 = arith.mulf %29, %14 : vector<8x32xf32>
    %37 = arith.mulf %28, %34 : vector<8x32xf32>
    %38 = arith.addf %36, %37 : vector<8x32xf32>
    %39 = math.tanh %38 : vector<8x32xf32>
    %40 = arith.mulf %35, %39 : vector<8x32xf32>
    %41 = arith.truncf %40 : vector<8x32xf32> to vector<8x32xbf16>
    %42 = arith.index_cast %c0_i32_14 : i32 to index
    %c0_23 = arith.constant 0 : index
    %c0_24 = arith.constant 0 : index
    %43 = vector.load %arg5[%42, %c0_23, %c0_24] : memref<8x8x32xbf16, #tpu.memory_space<vmem>>, vector<1x8x32xbf16>
    %44 = vector.shape_cast %43 : vector<1x8x32xbf16> to vector<8x32xbf16>
    %45 = vector.shape_cast %41 : vector<8x32xbf16> to vector<1x8x32xbf16>
    tpu.vector_store %arg5[%42, %c0_23, %c0_24], %45 {strides = array<i32>} : memref<8x8x32xbf16, #tpu.memory_space<vmem>>, vector<1x8x32xbf16>,
    %c1_i32 = arith.constant 1 : i32
    %46 = arith.index_cast %c1_i32 : i32 to index
    %c0_25 = arith.constant 0 : index
    %c0_26 = arith.constant 0 : index
    %47 = vector.load %arg10[%46, %c0_25, %c0_26] : memref<8x8x128xbf16, #tpu.memory_space<vmem>>, vector<1x8x128xbf16>
    %48 = vector.shape_cast %47 : vector<1x8x128xbf16> to vector<8x128xbf16>
    %49 = arith.extf %48 : vector<8x128xbf16> to vector<8x128xf32>
    %50 = arith.truncf %40 : vector<8x32xf32> to vector<8x32xbf16>
    %c0_27 = arith.constant 0 : index
    %c0_28 = arith.constant 0 : index
    %51 = vector.load %arg3[%c0_27, %c0_28] : memref<32x128xbf16, #tpu.memory_space<vmem>>, vector<32x128xbf16>
    %cst_29 = arith.constant dense<0.000000e+00> : vector<8x128xf32>
    %52 = tpu.matmul %50, %51, %cst_29 {dimension_numbers = #tpu.dot_dimension_numbers<[1], [0], [0], [1], [0, 0, 1, 1], [], []>} : vector<8x32xbf16>, vector<32x128xbf16>, vector<8x128xf32> -> vector<8x128xf32>
    %53 = arith.addf %49, %52 : vector<8x128xf32>
    %54 = arith.negf %53 : vector<8x128xf32>
    %55 = math.exp %54 : vector<8x128xf32>
    %cst_30 = arith.constant 1.000000e+00 : f32
    %56 = vector.broadcast %cst_30 : f32 to vector<8x128xf32>
    %57 = arith.addf %56, %55 : vector<8x128xf32>
    %58 = arith.divf %56, %57 : vector<8x128xf32>
    %59 = vector.extract_strided_slice %58 {offsets = [0, 0], sizes = [8, 32], strides = [1, 1]} : vector<8x128xf32> to vector<8x32xf32>
    %60 = vector.extract_strided_slice %58 {offsets = [0, 32], sizes = [8, 32], strides = [1, 1]} : vector<8x128xf32> to vector<8x32xf32>
    %61 = vector.extract_strided_slice %58 {offsets = [0, 64], sizes = [8, 32], strides = [1, 1]} : vector<8x128xf32> to vector<8x32xf32>
    %cst_31 = arith.constant 2.000000e+00 : f32
    %62 = vector.broadcast %cst_31 : f32 to vector<8x32xf32>
    %63 = arith.mulf %62, %61 : vector<8x32xf32>
    %cst_32 = arith.constant 1.000000e+00 : f32
    %64 = vector.broadcast %cst_32 : f32 to vector<8x32xf32>
    %65 = arith.subf %63, %64 : vector<8x32xf32>
    %66 = vector.extract_strided_slice %58 {offsets = [0, 96], sizes = [8, 32], strides = [1, 1]} : vector<8x128xf32> to vector<8x32xf32>
    %67 = arith.mulf %60, %38 : vector<8x32xf32>
    %68 = arith.mulf %59, %65 : vector<8x32xf32>
    %69 = arith.addf %67, %68 : vector<8x32xf32>
    %70 = math.tanh %69 : vector<8x32xf32>
    %71 = arith.mulf %66, %70 : vector<8x32xf32>
    %72 = arith.truncf %71 : vector<8x32xf32> to vector<8x32xbf16>
    %73 = arith.index_cast %c1_i32 : i32 to index
    %c0_33 = arith.constant 0 : index
    %c0_34 = arith.constant 0 : index
    %74 = vector.load %arg5[%73, %c0_33, %c0_34] : memref<8x8x32xbf16, #tpu.memory_space<vmem>>, vector<1x8x32xbf16>
    %75 = vector.shape_cast %74 : vector<1x8x32xbf16> to vector<8x32xbf16>
    %76 = vector.shape_cast %72 : vector<8x32xbf16> to vector<1x8x32xbf16>
    tpu.vector_store %arg5[%73, %c0_33, %c0_34], %76 {strides = array<i32>} : memref<8x8x32xbf16, #tpu.memory_space<vmem>>, vector<1x8x32xbf16>,
    %c2_i32 = arith.constant 2 : i32
    %77 = arith.index_cast %c2_i32 : i32 to index
    %c0_35 = arith.constant 0 : index
    %c0_36 = arith.constant 0 : index
    %78 = vector.load %arg10[%77, %c0_35, %c0_36] : memref<8x8x128xbf16, #tpu.memory_space<vmem>>, vector<1x8x128xbf16>
    %79 = vector.shape_cast %78 : vector<1x8x128xbf16> to vector<8x128xbf16>
    %80 = arith.extf %79 : vector<8x128xbf16> to vector<8x128xf32>
    %81 = arith.truncf %71 : vector<8x32xf32> to vector<8x32xbf16>
    %c0_37 = arith.constant 0 : index
    %c0_38 = arith.constant 0 : index
    %82 = vector.load %arg3[%c0_37, %c0_38] : memref<32x128xbf16, #tpu.memory_space<vmem>>, vector<32x128xbf16>
    %cst_39 = arith.constant dense<0.000000e+00> : vector<8x128xf32>
    %83 = tpu.matmul %81, %82, %cst_39 {dimension_numbers = #tpu.dot_dimension_numbers<[1], [0], [0], [1], [0, 0, 1, 1], [], []>} : vector<8x32xbf16>, vector<32x128xbf16>, vector<8x128xf32> -> vector<8x128xf32>
    %84 = arith.addf %80, %83 : vector<8x128xf32>
    %85 = arith.negf %84 : vector<8x128xf32>
    %86 = math.exp %85 : vector<8x128xf32>
    %cst_40 = arith.constant 1.000000e+00 : f32
    %87 = vector.broadcast %cst_40 : f32 to vector<8x128xf32>
    %88 = arith.addf %87, %86 : vector<8x128xf32>
    %89 = arith.divf %87, %88 : vector<8x128xf32>
    %90 = vector.extract_strided_slice %89 {offsets = [0, 0], sizes = [8, 32], strides = [1, 1]} : vector<8x128xf32> to vector<8x32xf32>
    %91 = vector.extract_strided_slice %89 {offsets = [0, 32], sizes = [8, 32], strides = [1, 1]} : vector<8x128xf32> to vector<8x32xf32>
    %92 = vector.extract_strided_slice %89 {offsets = [0, 64], sizes = [8, 32], strides = [1, 1]} : vector<8x128xf32> to vector<8x32xf32>
    %cst_41 = arith.constant 2.000000e+00 : f32
    %93 = vector.broadcast %cst_41 : f32 to vector<8x32xf32>
    %94 = arith.mulf %93, %92 : vector<8x32xf32>
    %cst_42 = arith.constant 1.000000e+00 : f32
    %95 = vector.broadcast %cst_42 : f32 to vector<8x32xf32>
    %96 = arith.subf %94, %95 : vector<8x32xf32>
    %97 = vector.extract_strided_slice %89 {offsets = [0, 96], sizes = [8, 32], strides = [1, 1]} : vector<8x128xf32> to vector<8x32xf32>
    %98 = arith.mulf %91, %69 : vector<8x32xf32>
    %99 = arith.mulf %90, %96 : vector<8x32xf32>
    %100 = arith.addf %98, %99 : vector<8x32xf32>
    %101 = math.tanh %100 : vector<8x32xf32>
    %102 = arith.mulf %97, %101 : vector<8x32xf32>
    %103 = arith.truncf %102 : vector<8x32xf32> to vector<8x32xbf16>
    %104 = arith.index_cast %c2_i32 : i32 to index
    %c0_43 = arith.constant 0 : index
    %c0_44 = arith.constant 0 : index
    %105 = vector.load %arg5[%104, %c0_43, %c0_44] : memref<8x8x32xbf16, #tpu.memory_space<vmem>>, vector<1x8x32xbf16>
    %106 = vector.shape_cast %105 : vector<1x8x32xbf16> to vector<8x32xbf16>
    %107 = vector.shape_cast %103 : vector<8x32xbf16> to vector<1x8x32xbf16>
    tpu.vector_store %arg5[%104, %c0_43, %c0_44], %107 {strides = array<i32>} : memref<8x8x32xbf16, #tpu.memory_space<vmem>>, vector<1x8x32xbf16>,
    %c3_i32 = arith.constant 3 : i32
    %108 = arith.index_cast %c3_i32 : i32 to index
    %c0_45 = arith.constant 0 : index
    %c0_46 = arith.constant 0 : index
    %109 = vector.load %arg10[%108, %c0_45, %c0_46] : memref<8x8x128xbf16, #tpu.memory_space<vmem>>, vector<1x8x128xbf16>
    %110 = vector.shape_cast %109 : vector<1x8x128xbf16> to vector<8x128xbf16>
    %111 = arith.extf %110 : vector<8x128xbf16> to vector<8x128xf32>
    %112 = arith.truncf %102 : vector<8x32xf32> to vector<8x32xbf16>
    %c0_47 = arith.constant 0 : index
    %c0_48 = arith.constant 0 : index
    %113 = vector.load %arg3[%c0_47, %c0_48] : memref<32x128xbf16, #tpu.memory_space<vmem>>, vector<32x128xbf16>
    %cst_49 = arith.constant dense<0.000000e+00> : vector<8x128xf32>
    %114 = tpu.matmul %112, %113, %cst_49 {dimension_numbers = #tpu.dot_dimension_numbers<[1], [0], [0], [1], [0, 0, 1, 1], [], []>} : vector<8x32xbf16>, vector<32x128xbf16>, vector<8x128xf32> -> vector<8x128xf32>
    %115 = arith.addf %111, %114 : vector<8x128xf32>
    %116 = arith.negf %115 : vector<8x128xf32>
    %117 = math.exp %116 : vector<8x128xf32>
    %cst_50 = arith.constant 1.000000e+00 : f32
    %118 = vector.broadcast %cst_50 : f32 to vector<8x128xf32>
    %119 = arith.addf %118, %117 : vector<8x128xf32>
    %120 = arith.divf %118, %119 : vector<8x128xf32>
    %121 = vector.extract_strided_slice %120 {offsets = [0, 0], sizes = [8, 32], strides = [1, 1]} : vector<8x128xf32> to vector<8x32xf32>
    %122 = vector.extract_strided_slice %120 {offsets = [0, 32], sizes = [8, 32], strides = [1, 1]} : vector<8x128xf32> to vector<8x32xf32>
    %123 = vector.extract_strided_slice %120 {offsets = [0, 64], sizes = [8, 32], strides = [1, 1]} : vector<8x128xf32> to vector<8x32xf32>
    %cst_51 = arith.constant 2.000000e+00 : f32
    %124 = vector.broadcast %cst_51 : f32 to vector<8x32xf32>
    %125 = arith.mulf %124, %123 : vector<8x32xf32>
    %cst_52 = arith.constant 1.000000e+00 : f32
    %126 = vector.broadcast %cst_52 : f32 to vector<8x32xf32>
    %127 = arith.subf %125, %126 : vector<8x32xf32>
    %128 = vector.extract_strided_slice %120 {offsets = [0, 96], sizes = [8, 32], strides = [1, 1]} : vector<8x128xf32> to vector<8x32xf32>
    %129 = arith.mulf %122, %100 : vector<8x32xf32>
    %130 = arith.mulf %121, %127 : vector<8x32xf32>
    %131 = arith.addf %129, %130 : vector<8x32xf32>
    %132 = math.tanh %131 : vector<8x32xf32>
    %133 = arith.mulf %128, %132 : vector<8x32xf32>
    %134 = arith.truncf %133 : vector<8x32xf32> to vector<8x32xbf16>
    %135 = arith.index_cast %c3_i32 : i32 to index
    %c0_53 = arith.constant 0 : index
    %c0_54 = arith.constant 0 : index
    %136 = vector.load %arg5[%135, %c0_53, %c0_54] : memref<8x8x32xbf16, #tpu.memory_space<vmem>>, vector<1x8x32xbf16>
    %137 = vector.shape_cast %136 : vector<1x8x32xbf16> to vector<8x32xbf16>
    %138 = vector.shape_cast %134 : vector<8x32xbf16> to vector<1x8x32xbf16>
    tpu.vector_store %arg5[%135, %c0_53, %c0_54], %138 {strides = array<i32>} : memref<8x8x32xbf16, #tpu.memory_space<vmem>>, vector<1x8x32xbf16>,
    %c4_i32 = arith.constant 4 : i32
    %139 = arith.index_cast %c4_i32 : i32 to index
    %c0_55 = arith.constant 0 : index
    %c0_56 = arith.constant 0 : index
    %140 = vector.load %arg10[%139, %c0_55, %c0_56] : memref<8x8x128xbf16, #tpu.memory_space<vmem>>, vector<1x8x128xbf16>
    %141 = vector.shape_cast %140 : vector<1x8x128xbf16> to vector<8x128xbf16>
    %142 = arith.extf %141 : vector<8x128xbf16> to vector<8x128xf32>
    %143 = arith.truncf %133 : vector<8x32xf32> to vector<8x32xbf16>
    %c0_57 = arith.constant 0 : index
    %c0_58 = arith.constant 0 : index
    %144 = vector.load %arg3[%c0_57, %c0_58] : memref<32x128xbf16, #tpu.memory_space<vmem>>, vector<32x128xbf16>
    %cst_59 = arith.constant dense<0.000000e+00> : vector<8x128xf32>
    %145 = tpu.matmul %143, %144, %cst_59 {dimension_numbers = #tpu.dot_dimension_numbers<[1], [0], [0], [1], [0, 0, 1, 1], [], []>} : vector<8x32xbf16>, vector<32x128xbf16>, vector<8x128xf32> -> vector<8x128xf32>
    %146 = arith.addf %142, %145 : vector<8x128xf32>
    %147 = arith.negf %146 : vector<8x128xf32>
    %148 = math.exp %147 : vector<8x128xf32>
    %cst_60 = arith.constant 1.000000e+00 : f32
    %149 = vector.broadcast %cst_60 : f32 to vector<8x128xf32>
    %150 = arith.addf %149, %148 : vector<8x128xf32>
    %151 = arith.divf %149, %150 : vector<8x128xf32>
    %152 = vector.extract_strided_slice %151 {offsets = [0, 0], sizes = [8, 32], strides = [1, 1]} : vector<8x128xf32> to vector<8x32xf32>
    %153 = vector.extract_strided_slice %151 {offsets = [0, 32], sizes = [8, 32], strides = [1, 1]} : vector<8x128xf32> to vector<8x32xf32>
    %154 = vector.extract_strided_slice %151 {offsets = [0, 64], sizes = [8, 32], strides = [1, 1]} : vector<8x128xf32> to vector<8x32xf32>
    %cst_61 = arith.constant 2.000000e+00 : f32
    %155 = vector.broadcast %cst_61 : f32 to vector<8x32xf32>
    %156 = arith.mulf %155, %154 : vector<8x32xf32>
    %cst_62 = arith.constant 1.000000e+00 : f32
    %157 = vector.broadcast %cst_62 : f32 to vector<8x32xf32>
    %158 = arith.subf %156, %157 : vector<8x32xf32>
    %159 = vector.extract_strided_slice %151 {offsets = [0, 96], sizes = [8, 32], strides = [1, 1]} : vector<8x128xf32> to vector<8x32xf32>
    %160 = arith.mulf %153, %131 : vector<8x32xf32>
    %161 = arith.mulf %152, %158 : vector<8x32xf32>
    %162 = arith.addf %160, %161 : vector<8x32xf32>
    %163 = math.tanh %162 : vector<8x32xf32>
    %164 = arith.mulf %159, %163 : vector<8x32xf32>
    %165 = arith.truncf %164 : vector<8x32xf32> to vector<8x32xbf16>
    %166 = arith.index_cast %c4_i32 : i32 to index
    %c0_63 = arith.constant 0 : index
    %c0_64 = arith.constant 0 : index
    %167 = vector.load %arg5[%166, %c0_63, %c0_64] : memref<8x8x32xbf16, #tpu.memory_space<vmem>>, vector<1x8x32xbf16>
    %168 = vector.shape_cast %167 : vector<1x8x32xbf16> to vector<8x32xbf16>
    %169 = vector.shape_cast %165 : vector<8x32xbf16> to vector<1x8x32xbf16>
    tpu.vector_store %arg5[%166, %c0_63, %c0_64], %169 {strides = array<i32>} : memref<8x8x32xbf16, #tpu.memory_space<vmem>>, vector<1x8x32xbf16>,
    %c5_i32 = arith.constant 5 : i32
    %170 = arith.index_cast %c5_i32 : i32 to index
    %c0_65 = arith.constant 0 : index
    %c0_66 = arith.constant 0 : index
    %171 = vector.load %arg10[%170, %c0_65, %c0_66] : memref<8x8x128xbf16, #tpu.memory_space<vmem>>, vector<1x8x128xbf16>
    %172 = vector.shape_cast %171 : vector<1x8x128xbf16> to vector<8x128xbf16>
    %173 = arith.extf %172 : vector<8x128xbf16> to vector<8x128xf32>
    %174 = arith.truncf %164 : vector<8x32xf32> to vector<8x32xbf16>
    %c0_67 = arith.constant 0 : index
    %c0_68 = arith.constant 0 : index
    %175 = vector.load %arg3[%c0_67, %c0_68] : memref<32x128xbf16, #tpu.memory_space<vmem>>, vector<32x128xbf16>
    %cst_69 = arith.constant dense<0.000000e+00> : vector<8x128xf32>
    %176 = tpu.matmul %174, %175, %cst_69 {dimension_numbers = #tpu.dot_dimension_numbers<[1], [0], [0], [1], [0, 0, 1, 1], [], []>} : vector<8x32xbf16>, vector<32x128xbf16>, vector<8x128xf32> -> vector<8x128xf32>
    %177 = arith.addf %173, %176 : vector<8x128xf32>
    %178 = arith.negf %177 : vector<8x128xf32>
    %179 = math.exp %178 : vector<8x128xf32>
    %cst_70 = arith.constant 1.000000e+00 : f32
    %180 = vector.broadcast %cst_70 : f32 to vector<8x128xf32>
    %181 = arith.addf %180, %179 : vector<8x128xf32>
    %182 = arith.divf %180, %181 : vector<8x128xf32>
    %183 = vector.extract_strided_slice %182 {offsets = [0, 0], sizes = [8, 32], strides = [1, 1]} : vector<8x128xf32> to vector<8x32xf32>
    %184 = vector.extract_strided_slice %182 {offsets = [0, 32], sizes = [8, 32], strides = [1, 1]} : vector<8x128xf32> to vector<8x32xf32>
    %185 = vector.extract_strided_slice %182 {offsets = [0, 64], sizes = [8, 32], strides = [1, 1]} : vector<8x128xf32> to vector<8x32xf32>
    %cst_71 = arith.constant 2.000000e+00 : f32
    %186 = vector.broadcast %cst_71 : f32 to vector<8x32xf32>
    %187 = arith.mulf %186, %185 : vector<8x32xf32>
    %cst_72 = arith.constant 1.000000e+00 : f32
    %188 = vector.broadcast %cst_72 : f32 to vector<8x32xf32>
    %189 = arith.subf %187, %188 : vector<8x32xf32>
    %190 = vector.extract_strided_slice %182 {offsets = [0, 96], sizes = [8, 32], strides = [1, 1]} : vector<8x128xf32> to vector<8x32xf32>
    %191 = arith.mulf %184, %162 : vector<8x32xf32>
    %192 = arith.mulf %183, %189 : vector<8x32xf32>
    %193 = arith.addf %191, %192 : vector<8x32xf32>
    %194 = math.tanh %193 : vector<8x32xf32>
    %195 = arith.mulf %190, %194 : vector<8x32xf32>
    %196 = arith.truncf %195 : vector<8x32xf32> to vector<8x32xbf16>
    %197 = arith.index_cast %c5_i32 : i32 to index
    %c0_73 = arith.constant 0 : index
    %c0_74 = arith.constant 0 : index
    %198 = vector.load %arg5[%197, %c0_73, %c0_74] : memref<8x8x32xbf16, #tpu.memory_space<vmem>>, vector<1x8x32xbf16>
    %199 = vector.shape_cast %198 : vector<1x8x32xbf16> to vector<8x32xbf16>
    %200 = vector.shape_cast %196 : vector<8x32xbf16> to vector<1x8x32xbf16>
    tpu.vector_store %arg5[%197, %c0_73, %c0_74], %200 {strides = array<i32>} : memref<8x8x32xbf16, #tpu.memory_space<vmem>>, vector<1x8x32xbf16>,
    %c6_i32 = arith.constant 6 : i32
    %201 = arith.index_cast %c6_i32 : i32 to index
    %c0_75 = arith.constant 0 : index
    %c0_76 = arith.constant 0 : index
    %202 = vector.load %arg10[%201, %c0_75, %c0_76] : memref<8x8x128xbf16, #tpu.memory_space<vmem>>, vector<1x8x128xbf16>
    %203 = vector.shape_cast %202 : vector<1x8x128xbf16> to vector<8x128xbf16>
    %204 = arith.extf %203 : vector<8x128xbf16> to vector<8x128xf32>
    %205 = arith.truncf %195 : vector<8x32xf32> to vector<8x32xbf16>
    %c0_77 = arith.constant 0 : index
    %c0_78 = arith.constant 0 : index
    %206 = vector.load %arg3[%c0_77, %c0_78] : memref<32x128xbf16, #tpu.memory_space<vmem>>, vector<32x128xbf16>
    %cst_79 = arith.constant dense<0.000000e+00> : vector<8x128xf32>
    %207 = tpu.matmul %205, %206, %cst_79 {dimension_numbers = #tpu.dot_dimension_numbers<[1], [0], [0], [1], [0, 0, 1, 1], [], []>} : vector<8x32xbf16>, vector<32x128xbf16>, vector<8x128xf32> -> vector<8x128xf32>
    %208 = arith.addf %204, %207 : vector<8x128xf32>
    %209 = arith.negf %208 : vector<8x128xf32>
    %210 = math.exp %209 : vector<8x128xf32>
    %cst_80 = arith.constant 1.000000e+00 : f32
    %211 = vector.broadcast %cst_80 : f32 to vector<8x128xf32>
    %212 = arith.addf %211, %210 : vector<8x128xf32>
    %213 = arith.divf %211, %212 : vector<8x128xf32>
    %214 = vector.extract_strided_slice %213 {offsets = [0, 0], sizes = [8, 32], strides = [1, 1]} : vector<8x128xf32> to vector<8x32xf32>
    %215 = vector.extract_strided_slice %213 {offsets = [0, 32], sizes = [8, 32], strides = [1, 1]} : vector<8x128xf32> to vector<8x32xf32>
    %216 = vector.extract_strided_slice %213 {offsets = [0, 64], sizes = [8, 32], strides = [1, 1]} : vector<8x128xf32> to vector<8x32xf32>
    %cst_81 = arith.constant 2.000000e+00 : f32
    %217 = vector.broadcast %cst_81 : f32 to vector<8x32xf32>
    %218 = arith.mulf %217, %216 : vector<8x32xf32>
    %cst_82 = arith.constant 1.000000e+00 : f32
    %219 = vector.broadcast %cst_82 : f32 to vector<8x32xf32>
    %220 = arith.subf %218, %219 : vector<8x32xf32>
    %221 = vector.extract_strided_slice %213 {offsets = [0, 96], sizes = [8, 32], strides = [1, 1]} : vector<8x128xf32> to vector<8x32xf32>
    %222 = arith.mulf %215, %193 : vector<8x32xf32>
    %223 = arith.mulf %214, %220 : vector<8x32xf32>
    %224 = arith.addf %222, %223 : vector<8x32xf32>
    %225 = math.tanh %224 : vector<8x32xf32>
    %226 = arith.mulf %221, %225 : vector<8x32xf32>
    %227 = arith.truncf %226 : vector<8x32xf32> to vector<8x32xbf16>
    %228 = arith.index_cast %c6_i32 : i32 to index
    %c0_83 = arith.constant 0 : index
    %c0_84 = arith.constant 0 : index
    %229 = vector.load %arg5[%228, %c0_83, %c0_84] : memref<8x8x32xbf16, #tpu.memory_space<vmem>>, vector<1x8x32xbf16>
    %230 = vector.shape_cast %229 : vector<1x8x32xbf16> to vector<8x32xbf16>
    %231 = vector.shape_cast %227 : vector<8x32xbf16> to vector<1x8x32xbf16>
    tpu.vector_store %arg5[%228, %c0_83, %c0_84], %231 {strides = array<i32>} : memref<8x8x32xbf16, #tpu.memory_space<vmem>>, vector<1x8x32xbf16>,
    %c7_i32 = arith.constant 7 : i32
    %232 = arith.index_cast %c7_i32 : i32 to index
    %c0_85 = arith.constant 0 : index
    %c0_86 = arith.constant 0 : index
    %233 = vector.load %arg10[%232, %c0_85, %c0_86] : memref<8x8x128xbf16, #tpu.memory_space<vmem>>, vector<1x8x128xbf16>
    %234 = vector.shape_cast %233 : vector<1x8x128xbf16> to vector<8x128xbf16>
    %235 = arith.extf %234 : vector<8x128xbf16> to vector<8x128xf32>
    %236 = arith.truncf %226 : vector<8x32xf32> to vector<8x32xbf16>
    %c0_87 = arith.constant 0 : index
    %c0_88 = arith.constant 0 : index
    %237 = vector.load %arg3[%c0_87, %c0_88] : memref<32x128xbf16, #tpu.memory_space<vmem>>, vector<32x128xbf16>
    %cst_89 = arith.constant dense<0.000000e+00> : vector<8x128xf32>
    %238 = tpu.matmul %236, %237, %cst_89 {dimension_numbers = #tpu.dot_dimension_numbers<[1], [0], [0], [1], [0, 0, 1, 1], [], []>} : vector<8x32xbf16>, vector<32x128xbf16>, vector<8x128xf32> -> vector<8x128xf32>
    %239 = arith.addf %235, %238 : vector<8x128xf32>
    %240 = arith.negf %239 : vector<8x128xf32>
    %241 = math.exp %240 : vector<8x128xf32>
    %cst_90 = arith.constant 1.000000e+00 : f32
    %242 = vector.broadcast %cst_90 : f32 to vector<8x128xf32>
    %243 = arith.addf %242, %241 : vector<8x128xf32>
    %244 = arith.divf %242, %243 : vector<8x128xf32>
    %245 = vector.extract_strided_slice %244 {offsets = [0, 0], sizes = [8, 32], strides = [1, 1]} : vector<8x128xf32> to vector<8x32xf32>
    %246 = vector.extract_strided_slice %244 {offsets = [0, 32], sizes = [8, 32], strides = [1, 1]} : vector<8x128xf32> to vector<8x32xf32>
    %247 = vector.extract_strided_slice %244 {offsets = [0, 64], sizes = [8, 32], strides = [1, 1]} : vector<8x128xf32> to vector<8x32xf32>
    %cst_91 = arith.constant 2.000000e+00 : f32
    %248 = vector.broadcast %cst_91 : f32 to vector<8x32xf32>
    %249 = arith.mulf %248, %247 : vector<8x32xf32>
    %cst_92 = arith.constant 1.000000e+00 : f32
    %250 = vector.broadcast %cst_92 : f32 to vector<8x32xf32>
    %251 = arith.subf %249, %250 : vector<8x32xf32>
    %252 = vector.extract_strided_slice %244 {offsets = [0, 96], sizes = [8, 32], strides = [1, 1]} : vector<8x128xf32> to vector<8x32xf32>
    %253 = arith.mulf %246, %224 : vector<8x32xf32>
    %254 = arith.mulf %245, %251 : vector<8x32xf32>
    %255 = arith.addf %253, %254 : vector<8x32xf32>
    %256 = math.tanh %255 : vector<8x32xf32>
    %257 = arith.mulf %252, %256 : vector<8x32xf32>
    %258 = arith.truncf %257 : vector<8x32xf32> to vector<8x32xbf16>
    %259 = arith.index_cast %c7_i32 : i32 to index
    %c0_93 = arith.constant 0 : index
    %c0_94 = arith.constant 0 : index
    %260 = vector.load %arg5[%259, %c0_93, %c0_94] : memref<8x8x32xbf16, #tpu.memory_space<vmem>>, vector<1x8x32xbf16>
    %261 = vector.shape_cast %260 : vector<1x8x32xbf16> to vector<8x32xbf16>
    %262 = vector.shape_cast %258 : vector<8x32xbf16> to vector<1x8x32xbf16>
    tpu.vector_store %arg5[%259, %c0_93, %c0_94], %262 {strides = array<i32>} : memref<8x8x32xbf16, #tpu.memory_space<vmem>>, vector<1x8x32xbf16>,
    %c8_i32 = arith.constant 8 : i32
    %c0_95 = arith.constant 0 : index
    %c0_96 = arith.constant 0 : index
    %263 = vector.load %arg8[%c0_95, %c0_96] : memref<8x32xf32, #tpu.memory_space<vmem>>, vector<8x32xf32>
    tpu.vector_store %arg8[%c0_95, %c0_96], %257 {strides = array<i32>} : memref<8x32xf32, #tpu.memory_space<vmem>>, vector<8x32xf32>,
    %c0_97 = arith.constant 0 : index
    %c0_98 = arith.constant 0 : index
    %264 = vector.load %arg9[%c0_97, %c0_98] : memref<8x32xf32, #tpu.memory_space<vmem>>, vector<8x32xf32>
    tpu.vector_store %arg9[%c0_97, %c0_98], %255 {strides = array<i32>} : memref<8x32xf32, #tpu.memory_space<vmem>>, vector<8x32xf32>,
    %c0_99 = arith.constant 0 : index
    %c0_100 = arith.constant 0 : index
    %265 = vector.load %arg6[%c0_99, %c0_100] : memref<8x32xf32, #tpu.memory_space<vmem>>, vector<8x32xf32>
    tpu.vector_store %arg6[%c0_99, %c0_100], %257 {strides = array<i32>} : memref<8x32xf32, #tpu.memory_space<vmem>>, vector<8x32xf32>,
    %c0_101 = arith.constant 0 : index
    %c0_102 = arith.constant 0 : index
    %266 = vector.load %arg7[%c0_101, %c0_102] : memref<8x32xf32, #tpu.memory_space<vmem>>, vector<8x32xf32>
    tpu.vector_store %arg7[%c0_101, %c0_102], %255 {strides = array<i32>} : memref<8x32xf32, #tpu.memory_space<vmem>>, vector<8x32xf32>,
    return
  }
  func.func @transform_0(%arg0: i32) -> (i32, i32, i32) {
    %c0_i32 = arith.constant 0 : i32
    %c0_i32_0 = arith.constant 0 : i32
    %c0_i32_1 = arith.constant 0 : i32
    return %arg0, %c0_i32, %c0_i32_0 : i32, i32, i32
  }
  func.func @transform_1(%arg0: i32) -> (i32, i32) {
    %c0_i32 = arith.constant 0 : i32
    %c0_i32_0 = arith.constant 0 : i32
    %c0_i32_1 = arith.constant 0 : i32
    return %c0_i32, %c0_i32_0 : i32, i32
  }
  func.func @transform_2(%arg0: i32) -> (i32, i32) {
    %c0_i32 = arith.constant 0 : i32
    %c0_i32_0 = arith.constant 0 : i32
    %c0_i32_1 = arith.constant 0 : i32
    return %c0_i32, %c0_i32_0 : i32, i32
  }
  func.func @transform_3(%arg0: i32) -> (i32, i32) {
    %c0_i32 = arith.constant 0 : i32
    %c0_i32_0 = arith.constant 0 : i32
    %c0_i32_1 = arith.constant 0 : i32
    return %c0_i32, %c0_i32_0 : i32, i32
  }
  func.func @transform_4(%arg0: i32) -> (i32, i32, i32) {
    %c0_i32 = arith.constant 0 : i32
    %c0_i32_0 = arith.constant 0 : i32
    %c0_i32_1 = arith.constant 0 : i32
    return %arg0, %c0_i32, %c0_i32_0 : i32, i32, i32
  }
  func.func @transform_5(%arg0: i32) -> (i32, i32) {
    %c0_i32 = arith.constant 0 : i32
    %c0_i32_0 = arith.constant 0 : i32
    %c0_i32_1 = arith.constant 0 : i32
    return %c0_i32, %c0_i32_0 : i32, i32
  }
  func.func @transform_6(%arg0: i32) -> (i32, i32) {
    %c0_i32 = arith.constant 0 : i32
    %c0_i32_0 = arith.constant 0 : i32
    %c0_i32_1 = arith.constant 0 : i32
    return %c0_i32, %c0_i32_0 : i32, i32
  }
}

</mosaic_0001>

<llo_original>
// kernel: lstm_torch_forward.3
$region0: #{lstm_torch_forward.3}
  #allocation0 [shape = 'u32[]', space=smem, size = 0x4, offset = 0x4, fixed_abs, tag = 'smem constant byte address 0x4 - core index']
  #allocation1 [shape = 'u32[144,128]{1,0:T(1,128)}', space=vmem, size = 0x12000, scoped, tag = 'internal scratch']
  %s0 = inlined_call_operand.vmem [shape: bf16[8,8,32], index: 0, kind: input, shape index: {}]
  %s1 = inlined_call_operand.vmem [shape: bf16[32,128], index: 1, kind: input, shape index: {}]
  %s2 = inlined_call_operand.vmem [shape: f32[1,128], index: 2, kind: input, shape index: {}]
  %s3 = inlined_call_operand.vmem [shape: f32[8,8,128], index: 3, kind: output, shape index: {}]
  %s4 = sld [smem:[#allocation0]]
  $region22: #{lstm_torch_forward.3} parent=0
    _
  %s6 = ssub.s32 1, %s4
  %s7 = scalar_select 0, %s6, %s4
  // Predicated region
  $region2: #{lstm_torch_forward.3} parent=0 // pred_check
    _
  $region3: #{lstm_torch_forward.3} parent=0 // pred_check_branch
    %9 = sbr.rel (0) target = $region5
  $region4: #{lstm_torch_forward.3} parent=0 // pred_region
    _
  $region5: #{lstm_torch_forward.3} parent=0 // pred_fallthru
    _
  // Predicated region
  $region6: #{lstm_torch_forward.3} parent=0 // pred_check
    _
  $region7: #{lstm_torch_forward.3} parent=0 // pred_check_branch
    %11 = sbr.rel (0) target = $region9
  $region8: #{lstm_torch_forward.3} parent=0 // pred_region
    _
  $region9: #{lstm_torch_forward.3} parent=0 // pred_fallthru
    _
  // Predicated region
  $region10: #{lstm_torch_forward.3} parent=0 // pred_check
    _
  $region11: #{lstm_torch_forward.3} parent=0 // pred_check_branch
    %13 = sbr.rel (0) target = $region13
  $region12: #{lstm_torch_forward.3} parent=0 // pred_region
    _
  $region13: #{lstm_torch_forward.3} parent=0 // pred_fallthru
    _
  %v15 = vld [vmem:[%s0] sm:$0xf]
  %v16 = vld [vmem:[%s0 + $0x4] sm:$0xf]
  %v17 = vld [vmem:[%s0 + $0x8] sm:$0xf]
  %v18 = vld [vmem:[%s0 + $0xc] sm:$0xf]
  %v19 = vld [vmem:[%s0 + $0x10] sm:$0xf]
  %v20 = vld [vmem:[%s0 + $0x14] sm:$0xf]
  %v21 = vld [vmem:[%s0 + $0x18] sm:$0xf]
  %v22 = vld [vmem:[%s0 + $0x1c] sm:$0xf]
  %v23 = vld [vmem:[%s1] sm:$0xf]
  %v24 = vld [vmem:[%s1 + $0x4] sm:$0xf]
  %v25 = vld [vmem:[%s1 + $0x8] sm:$0xf]
  %v26 = vld [vmem:[%s1 + $0xc] sm:$0xf]
  %v27 = vld [vmem:[%s2] sm:$0x1]
  %v29 = vlaneseq
  %v30 = vshrl.u32 %v29, 7
  %v31 = vsub.s32 0, %v30
  %v32 = vrot.slane %v27, %v31
  %v42 = vunpack.c.l.b16 %v15
  %v43 = vunpack.c.l.b16 %v16
  %v44 = vunpack.c.l.b16 %v17
  %v45 = vunpack.c.l.b16 %v18
  %v46 = vunpack.c.l.b16 %v19
  %v47 = vunpack.c.l.b16 %v20
  %v48 = vunpack.c.l.b16 %v21
  %v49 = vunpack.c.l.b16 %v22
  %v50 = vpack.c.b16 %v43, %v42
  %v51 = vpack.c.b16 %v45, %v44
  %v52 = vpack.c.b16 %v47, %v46
  %v53 = vpack.c.b16 %v49, %v48
  %v58 = vunpack.c.l.b16 %v23
  %v59 = vunpack.c.l.b16 %v24
  %v60 = vunpack.c.l.b16 %v25
  %v61 = vunpack.c.l.b16 %v26
  %v62 = vpack.c.b16 %v59, %v58
  %v63 = vpack.c.b16 %v61, %v60
  %vm66 = vcmask 261120
  %v68 = vsel %vm66, %v50, 0
  %v71 = vsel %vm66, %v51, 0
  %v74 = vsel %vm66, %v52, 0
  %v77 = vsel %vm66, %v53, 0
  %79 = vmatprep.subr.bf16.mxu0 0
  %80 = vmatpush1.bf16.msra.mxu0 %v62
  %81 = vmatprep.subr.bf16.mxu0 0
  %82 = vmatpush1.bf16.msra.mxu0 %v63
  %83 = vmatprep.subr.bf16.mxu0 0
  %84 = vmatpush1.bf16.msra.mxu0 0
  %85 = vmatprep.subr.bf16.mxu0 0
  %86 = vmatpush1.bf16.msra.mxu0 0
  %87 = vmatprep.subr.bf16.mxu0 0
  %88 = vmatpush1.bf16.msra.mxu0 0
  %89 = vmatprep.subr.bf16.mxu0 0
  %90 = vmatpush1.bf16.msra.mxu0 0
  %91 = vmatprep.subr.bf16.mxu0 0
  %92 = vmatpush1.bf16.msra.mxu0 0
  %93 = vmatprep.subr.bf16.mxu0 0
  %94 = vmatpush1.bf16.msra.mxu0 0
  %95 = vmatprep.subr.bf16.mxu0 0
  %96 = vmatpush1.bf16.msra.mxu0 0
  %97 = vmatprep.subr.bf16.mxu0 0
  %98 = vmatpush1.bf16.msra.mxu0 0
  %99 = vmatprep.subr.bf16.mxu0 0
  %100 = vmatpush1.bf16.msra.mxu0 0
  %101 = vmatprep.subr.bf16.mxu0 0
  %102 = vmatpush1.bf16.msra.mxu0 0
  %103 = vmatprep.subr.bf16.mxu0 0
  %104 = vmatpush1.bf16.msra.mxu0 0
  %105 = vmatprep.subr.bf16.mxu0 0
  %106 = vmatpush1.bf16.msra.mxu0 0
  %107 = vmatprep.subr.bf16.mxu0 0
  %108 = vmatpush1.bf16.msra.mxu0 0
  %109 = vmatprep.subr.bf16.mxu0 0
  %110 = vmatpush1.bf16.msra.mxu0 0
  %111 = vmatprep.mubr.bf16.mxu0 0
  %112 = vmatmul.mubr.bf16.gmra.mrb[0].mxu0 %v68
  %v113 = vpop.f32.mrb[0].mxu0
  %v114 = vadd.f32 %v32, %v113
  %v115 = vpop.f32.mrb[0].mxu0
  %v116 = vpop.f32.mrb[0].mxu0
  %v117 = vadd.f32 %v32, %v116
  %v118 = vpop.f32.mrb[0].mxu0
  %119 = vmatprep.mubr.bf16.mxu0 0
  %120 = vmatmul.mubr.bf16.gmra.mrb[0].mxu0 %v71
  %v121 = vpop.f32.mrb[0].mxu0
  %v122 = vadd.f32 %v32, %v121
  %v123 = vpop.f32.mrb[0].mxu0
  %v124 = vpop.f32.mrb[0].mxu0
  %v125 = vadd.f32 %v32, %v124
  %v126 = vpop.f32.mrb[0].mxu0
  %127 = vmatprep.mubr.bf16.mxu0 0
  %128 = vmatmul.mubr.bf16.gmra.mrb[0].mxu0 %v74
  %v129 = vpop.f32.mrb[0].mxu0
  %v130 = vadd.f32 %v32, %v129
  %v131 = vpop.f32.mrb[0].mxu0
  %v132 = vpop.f32.mrb[0].mxu0
  %v133 = vadd.f32 %v32, %v132
  %v134 = vpop.f32.mrb[0].mxu0
  %135 = vmatprep.mubr.bf16.mxu0 0
  %136 = vmatmul.mubr.bf16.gmra.mrb[0].mxu0 %v77
  %v137 = vpop.f32.mrb[0].mxu0
  %v138 = vadd.f32 %v32, %v137
  %v139 = vpop.f32.mrb[0].mxu0
  %v140 = vpop.f32.mrb[0].mxu0
  %v141 = vadd.f32 %v32, %v140
  %v142 = vpop.f32.mrb[0].mxu0
  %143 = vdwg.mxu0
  %v144 = vmax.f32 %v114, 0.0
  %v145 = vmax.f32 %v117, 0.0
  %v146 = vmax.f32 %v122, 0.0
  %v147 = vmax.f32 %v125, 0.0
  %v148 = vmax.f32 %v130, 0.0
  %v149 = vmax.f32 %v133, 0.0
  %v150 = vmax.f32 %v138, 0.0
  %v151 = vmax.f32 %v141, 0.0
  %v152 = vmax.f32 %v144, %v145
  %v153 = vsub.f32 %v144, %v152
  %v154 = vsub.f32 %v145, %v152
  %v155 = vsub.f32 %v146, %v152
  %v156 = vsub.f32 %v147, %v152
  %v157 = vsub.f32 %v148, %v152
  %v158 = vsub.f32 %v149, %v152
  %v159 = vsub.f32 %v150, %v152
  %v160 = vsub.f32 %v151, %v152
  %v161 = vmul.f32 %v153, 1.442695
  %v162 = vpow.pop %v161
  %v163 = vmul.f32 %v154, 1.442695
  %v164 = vpow.pop %v163
  %v165 = vadd.f32 %v162, %v164
  %v166 = vlog2.pop %v165
  %v167 = vmul.f32 %v166, 0.6931472
  %v168 = vsub.f32 %v153, %v167
  %v169 = vsub.f32 %v154, %v167
  %v170 = vsub.f32 %v155, %v167
  %v171 = vsub.f32 %v156, %v167
  %v172 = vsub.f32 %v157, %v167
  %v173 = vsub.f32 %v158, %v167
  %v174 = vsub.f32 %v159, %v167
  %v175 = vsub.f32 %v160, %v167
  %176 = vst [vmem:[%s3] sm:$0xff] %v168
  %177 = vst [vmem:[%s3 + $0x8] sm:$0xff] %v169
  %178 = vst [vmem:[%s3 + $0x10] sm:$0xff] %v170
  %179 = vst [vmem:[%s3 + $0x18] sm:$0xff] %v171
  %180 = vst [vmem:[%s3 + $0x20] sm:$0xff] %v172
  %181 = vst [vmem:[%s3 + $0x28] sm:$0xff] %v173
  %182 = vst [vmem:[%s3 + $0x30] sm:$0xff] %v174
  %183 = vst [vmem:[%s3 + $0x38] sm:$0xff] %v175
  // Predicated region
  $region14: #{lstm_torch_forward.3} parent=0 // pred_check
    _
  $region15: #{lstm_torch_forward.3} parent=0 // pred_check_branch
    %185 = sbr.rel (0) target = $region17
  $region16: #{lstm_torch_forward.3} parent=0 // pred_region
    _
  $region17: #{lstm_torch_forward.3} parent=0 // pred_fallthru
    _
  // Predicated region
  $region18: #{lstm_torch_forward.3} parent=0 // pred_check
    _
  $region19: #{lstm_torch_forward.3} parent=0 // pred_check_branch
    %187 = sbr.rel (0) target = $region21
  $region20: #{lstm_torch_forward.3} parent=0 // pred_region
    _
  $region21: #{lstm_torch_forward.3} parent=0 // pred_fallthru
    _

// kernel: lstm_torch_forward.2
$region0: #{lstm_torch_forward.2}
  #allocation0 [shape = 'u32[]', space=smem, size = 0x4, offset = 0x4, fixed_abs, tag = 'smem constant byte address 0x4 - core index']
  #allocation1 [shape = 'u32[144,128]{1,0:T(1,128)}', space=vmem, size = 0x12000, scoped, tag = 'internal scratch']
  #allocation2 [shape = 'f32[8,32]{1,0:T(8,128)}', space=vmem, size = 0x1000, scoped, tag = 'scratch operand']
  #allocation3 [shape = 'f32[8,32]{1,0:T(8,128)}', space=vmem, size = 0x1000, scoped, tag = 'scratch operand']
  #allocation4 [shape = 'bf16[8,8,128]{2,1,0:T(8,128)(2,1)}', space=vmem, size = 0x4000, scoped, tag = 'scratch operand']
  %s0 = inlined_call_operand.vmem [shape: bf16[8,8,16], index: 0, kind: input, shape index: {}]
  %s1 = inlined_call_operand.vmem [shape: bf16[16,128], index: 1, kind: input, shape index: {}]
  %s2 = inlined_call_operand.vmem [shape: bf16[32,128], index: 2, kind: input, shape index: {}]
  %s3 = inlined_call_operand.vmem [shape: f32[1,128], index: 3, kind: input, shape index: {}]
  %s4 = inlined_call_operand.vmem [shape: bf16[8,8,32], index: 4, kind: output, shape index: {0}]
  %s5 = inlined_call_operand.vmem [shape: f32[8,32], index: 5, kind: output, shape index: {1}]
  %s6 = inlined_call_operand.vmem [shape: f32[8,32], index: 6, kind: output, shape index: {2}]
  %7 = xla_tuple %s4, %s5, %s6
  %s8 = sld [smem:[#allocation0]]
  $region46: #{lstm_torch_forward.2} parent=0
    _
  %s10 = ssub.s32 1, %s8
  %s11 = scalar_select 0, %s10, %s8
  // Predicated region
  $region2: #{lstm_torch_forward.2} parent=0 // pred_check
    _
  $region3: #{lstm_torch_forward.2} parent=0 // pred_check_branch
    %13 = sbr.rel (0) target = $region5
  $region4: #{lstm_torch_forward.2} parent=0 // pred_region
    _
  $region5: #{lstm_torch_forward.2} parent=0 // pred_fallthru
    _
  // Predicated region
  $region6: #{lstm_torch_forward.2} parent=0 // pred_check
    _
  $region7: #{lstm_torch_forward.2} parent=0 // pred_check_branch
    %15 = sbr.rel (0) target = $region9
  $region8: #{lstm_torch_forward.2} parent=0 // pred_region
    _
  $region9: #{lstm_torch_forward.2} parent=0 // pred_fallthru
    _
  // Predicated region
  $region10: #{lstm_torch_forward.2} parent=0 // pred_check
    _
  $region11: #{lstm_torch_forward.2} parent=0 // pred_check_branch
    %17 = sbr.rel (0) target = $region13
  $region12: #{lstm_torch_forward.2} parent=0 // pred_region
    _
  $region13: #{lstm_torch_forward.2} parent=0 // pred_fallthru
    _
  // Predicated region
  $region14: #{lstm_torch_forward.2} parent=0 // pred_check
    _
  $region15: #{lstm_torch_forward.2} parent=0 // pred_check_branch
    %19 = sbr.rel (0) target = $region17
  $region16: #{lstm_torch_forward.2} parent=0 // pred_region
    _
  $region17: #{lstm_torch_forward.2} parent=0 // pred_fallthru
    _
  %p21 = scmp.eq.s32.totalorder 0, 0
  // Predicated region
  $region18: #{lstm_torch_forward.2} parent=0 // pred_check
    %p22 = pneg %p21
  $region19: #{lstm_torch_forward.2} parent=0 // pred_check_branch
    %24 = sbr.rel (%p22) target = $region21
  $region20: #{lstm_torch_forward.2} parent=0 // pred_region
    %vm25 = vcmask 261120
    %26 = vst.msk [vmem:[#allocation2] sm:$0xff] %vm25, 0.0
    %27 = vst.msk [vmem:[#allocation3] sm:$0xff] %vm25, 0.0
  $region21: #{lstm_torch_forward.2} parent=0 // pred_fallthru
    _
  %v28 = vld [vmem:[%s0] sm:$0xf]
  %v29 = vld [vmem:[%s0 + $0x4] sm:$0xf]
  %v30 = vld [vmem:[%s0 + $0x8] sm:$0xf]
  %v31 = vld [vmem:[%s0 + $0xc] sm:$0xf]
  %v32 = vld [vmem:[%s0 + $0x10] sm:$0xf]
  %v33 = vld [vmem:[%s0 + $0x14] sm:$0xf]
  %v34 = vld [vmem:[%s0 + $0x18] sm:$0xf]
  %v35 = vld [vmem:[%s0 + $0x1c] sm:$0xf]
  %v36 = vld [vmem:[%s1] sm:$0xf]
  %v37 = vld [vmem:[%s1 + $0x4] sm:$0xf]
  %v38 = vld [vmem:[%s3] sm:$0x1]
  %v40 = vlaneseq
  %v41 = vshrl.u32 %v40, 7
  %v42 = vsub.s32 0, %v41
  %v43 = vrot.slane %v38, %v42
  %v53 = vunpack.c.l.b16 %v28
  %v54 = vunpack.c.l.b16 %v29
  %v55 = vunpack.c.l.b16 %v30
  %v56 = vunpack.c.l.b16 %v31
  %v57 = vunpack.c.l.b16 %v32
  %v58 = vunpack.c.l.b16 %v33
  %v59 = vunpack.c.l.b16 %v34
  %v60 = vunpack.c.l.b16 %v35
  %v61 = vpack.c.b16 %v54, %v53
  %v62 = vpack.c.b16 %v56, %v55
  %v63 = vpack.c.b16 %v58, %v57
  %v64 = vpack.c.b16 %v60, %v59
  %v67 = vunpack.c.l.b16 %v36
  %v68 = vunpack.c.l.b16 %v37
  %v69 = vpack.c.b16 %v68, %v67
  %vm71 = vcmask 130048
  %v73 = vsel %vm71, %v61, 0
  %v76 = vsel %vm71, %v62, 0
  %v79 = vsel %vm71, %v63, 0
  %v82 = vsel %vm71, %v64, 0
  %84 = vmatprep.subr.bf16.mxu0 0
  %85 = vmatpush1.bf16.msra.mxu0 %v69
  %86 = vmatprep.subr.bf16.mxu0 0
  %87 = vmatpush1.bf16.msra.mxu0 0
  %88 = vmatprep.subr.bf16.mxu0 0
  %89 = vmatpush1.bf16.msra.mxu0 0
  %90 = vmatprep.subr.bf16.mxu0 0
  %91 = vmatpush1.bf16.msra.mxu0 0
  %92 = vmatprep.subr.bf16.mxu0 0
  %93 = vmatpush1.bf16.msra.mxu0 0
  %94 = vmatprep.subr.bf16.mxu0 0
  %95 = vmatpush1.bf16.msra.mxu0 0
  %96 = vmatprep.subr.bf16.mxu0 0
  %97 = vmatpush1.bf16.msra.mxu0 0
  %98 = vmatprep.subr.bf16.mxu0 0
  %99 = vmatpush1.bf16.msra.mxu0 0
  %100 = vmatprep.subr.bf16.mxu0 0
  %101 = vmatpush1.bf16.msra.mxu0 0
  %102 = vmatprep.subr.bf16.mxu0 0
  %103 = vmatpush1.bf16.msra.mxu0 0
  %104 = vmatprep.subr.bf16.mxu0 0
  %105 = vmatpush1.bf16.msra.mxu0 0
  %106 = vmatprep.subr.bf16.mxu0 0
  %107 = vmatpush1.bf16.msra.mxu0 0
  %108 = vmatprep.subr.bf16.mxu0 0
  %109 = vmatpush1.bf16.msra.mxu0 0
  %110 = vmatprep.subr.bf16.mxu0 0
  %111 = vmatpush1.bf16.msra.mxu0 0
  %112 = vmatprep.subr.bf16.mxu0 0
  %113 = vmatpush1.bf16.msra.mxu0 0
  %114 = vmatprep.subr.bf16.mxu0 0
  %115 = vmatpush1.bf16.msra.mxu0 0
  %116 = vmatprep.mubr.bf16.mxu0 0
  %117 = vmatmul.mubr.bf16.gmra.mrb[0].mxu0 %v73
  %v118 = vpop.f32.mrb[0].mxu0
  %v119 = vadd.f32 %v43, %v118
  %v120 = vpop.f32.mrb[0].mxu0
  %v121 = vpop.f32.mrb[0].mxu0
  %v122 = vadd.f32 %v43, %v121
  %v123 = vpop.f32.mrb[0].mxu0
  %124 = vmatprep.mubr.bf16.mxu0 0
  %125 = vmatmul.mubr.bf16.gmra.mrb[0].mxu0 %v76
  %v126 = vpop.f32.mrb[0].mxu0
  %v127 = vadd.f32 %v43, %v126
  %v128 = vpop.f32.mrb[0].mxu0
  %v129 = vpop.f32.mrb[0].mxu0
  %v130 = vadd.f32 %v43, %v129
  %v131 = vpop.f32.mrb[0].mxu0
  %132 = vmatprep.mubr.bf16.mxu0 0
  %133 = vmatmul.mubr.bf16.gmra.mrb[0].mxu0 %v79
  %v134 = vpop.f32.mrb[0].mxu0
  %v135 = vadd.f32 %v43, %v134
  %v136 = vpop.f32.mrb[0].mxu0
  %v137 = vpop.f32.mrb[0].mxu0
  %v138 = vadd.f32 %v43, %v137
  %v139 = vpop.f32.mrb[0].mxu0
  %140 = vmatprep.mubr.bf16.mxu0 0
  %141 = vmatmul.mubr.bf16.gmra.mrb[0].mxu0 %v82
  %v142 = vpop.f32.mrb[0].mxu0
  %v143 = vadd.f32 %v43, %v142
  %v144 = vpop.f32.mrb[0].mxu0
  %v145 = vpop.f32.mrb[0].mxu0
  %v146 = vadd.f32 %v43, %v145
  %v147 = vpop.f32.mrb[0].mxu0
  %148 = vdwg.mxu0
  %v149 = vpack.c.bf16 %v119, %v119
  %v150 = vpack.c.bf16 %v122, %v122
  %v151 = vpack.c.bf16 %v127, %v127
  %v152 = vpack.c.bf16 %v130, %v130
  %v153 = vpack.c.bf16 %v135, %v135
  %v154 = vpack.c.bf16 %v138, %v138
  %v155 = vpack.c.bf16 %v143, %v143
  %v156 = vpack.c.bf16 %v146, %v146
  %157 = vst [vmem:[#allocation4] sm:$0xf] %v149
  %158 = vst [vmem:[#allocation4 + $0x4] sm:$0xf] %v150
  %159 = vst [vmem:[#allocation4 + $0x8] sm:$0xf] %v151
  %160 = vst [vmem:[#allocation4 + $0xc] sm:$0xf] %v152
  %161 = vst [vmem:[#allocation4 + $0x10] sm:$0xf] %v153
  %162 = vst [vmem:[#allocation4 + $0x14] sm:$0xf] %v154
  %163 = vst [vmem:[#allocation4 + $0x18] sm:$0xf] %v155
  %164 = vst [vmem:[#allocation4 + $0x1c] sm:$0xf] %v156
  %v165 = vld [vmem:[#allocation2] sm:$0xff]
  %v166 = vld [vmem:[#allocation3] sm:$0xff]
  %v167 = vld [vmem:[#allocation4] sm:$0xf]
  %v168 = vunpack.c.l.bf16 %v167
  %v169 = vpack.c.bf16 %v165, %v165
  %v170 = vld [vmem:[%s2] sm:$0xf]
  %v171 = vld [vmem:[%s2 + $0x4] sm:$0xf]
  %v172 = vld [vmem:[%s2 + $0x8] sm:$0xf]
  %v173 = vld [vmem:[%s2 + $0xc] sm:$0xf]
  %v178 = vunpack.c.l.b16 %v170
  %v179 = vunpack.c.l.b16 %v171
  %v180 = vunpack.c.l.b16 %v172
  %v181 = vunpack.c.l.b16 %v173
  %v182 = vpack.c.b16 %v179, %v178
  %v183 = vpack.c.b16 %v181, %v180
  %vm186 = vcmask 261120
  %v188 = vsel %vm186, %v169, 0
  %190 = vmatprep.subr.bf16.mxu0 0
  %191 = vmatpush1.bf16.msra.mxu0 %v182
  %192 = vmatprep.subr.bf16.mxu0 0
  %193 = vmatpush1.bf16.msra.mxu0 %v183
  %194 = vmatprep.subr.bf16.mxu0 0
  %195 = vmatpush1.bf16.msra.mxu0 0
  %196 = vmatprep.subr.bf16.mxu0 0
  %197 = vmatpush1.bf16.msra.mxu0 0
  %198 = vmatprep.subr.bf16.mxu0 0
  %199 = vmatpush1.bf16.msra.mxu0 0
  %200 = vmatprep.subr.bf16.mxu0 0
  %201 = vmatpush1.bf16.msra.mxu0 0
  %202 = vmatprep.subr.bf16.mxu0 0
  %203 = vmatpush1.bf16.msra.mxu0 0
  %204 = vmatprep.subr.bf16.mxu0 0
  %205 = vmatpush1.bf16.msra.mxu0 0
  %206 = vmatprep.subr.bf16.mxu0 0
  %207 = vmatpush1.bf16.msra.mxu0 0
  %208 = vmatprep.subr.bf16.mxu0 0
  %209 = vmatpush1.bf16.msra.mxu0 0
  %210 = vmatprep.subr.bf16.mxu0 0
  %211 = vmatpush1.bf16.msra.mxu0 0
  %212 = vmatprep.subr.bf16.mxu0 0
  %213 = vmatpush1.bf16.msra.mxu0 0
  %214 = vmatprep.subr.bf16.mxu0 0
  %215 = vmatpush1.bf16.msra.mxu0 0
  %216 = vmatprep.subr.bf16.mxu0 0
  %217 = vmatpush1.bf16.msra.mxu0 0
  %218 = vmatprep.subr.bf16.mxu0 0
  %219 = vmatpush1.bf16.msra.mxu0 0
  %220 = vmatprep.subr.bf16.mxu0 0
  %221 = vmatpush1.bf16.msra.mxu0 0
  %222 = vmatprep.mubr.bf16.mxu0 0
  %223 = vmatmul.mubr.bf16.gmra.mrb[0].mxu0 %v188
  %v224 = vpop.f32.mrb[0].mxu0
  %v225 = vadd.f32 0.0, %v224
  %v226 = vpop.f32.mrb[0].mxu0
  %v227 = vpop.f32.mrb[0].mxu0
  %v228 = vpop.f32.mrb[0].mxu0
  %229 = vdwg.mxu0
  %v230 = vadd.f32 %v168, %v225
  %v231 = vxor.u32 %v230, 2147483648
  %v232 = vmul.f32 %v231, 1.442695
  %v233 = vpow.pop %v232
  %v234 = vadd.f32 %v233, 1.0
  %v235 = vrcp.pop %v234
  %v236 = vmul.f32 1.0, %v235
  %v237 = vmul.f32 %v236, 2.0
  %v238 = vsub.f32 %v237, 1.0
  %240 = vrot.lane.b32.xlu0 %v166, 32
  %v241 = vpop.permute.xlu0 %240
  %v243 = vmul.f32 %v236, %v241
  %245 = vrot.lane.b32.xlu0 %v238, 64
  %v246 = vpop.permute.xlu0 %245
  %v248 = vmul.f32 %v236, %v246
  %250 = vrot.lane.b32.xlu0 %v248, 32
  %v251 = vpop.permute.xlu0 %250
  %v253 = vadd.f32 %v243, %v251
  %v254 = vtanh.pop %v253
  %256 = vrot.lane.b32.xlu0 %v254, 64
  %v257 = vpop.permute.xlu0 %256
  %v259 = vmul.f32 %v236, %v257
  %v260 = vpack.c.bf16 %v259, %v259
  %v262 = vunpack.c.l.b16 %v260
  %v263 = vpack.c.b16 %v262, %v262
  %264 = vrot.lane.b32.xlu0 %v263, 32
  %v265 = vpop.permute.xlu0 %264
  %vm267 = vcmask 257024
  %268 = vst.msk [vmem:[%s4] sm:$0xf] %vm267, %v265
  %s269 = scalar_lea.vmem [#allocation4], 4
  %v270 = vld [vmem:[%s269] sm:$0xf]
  %v271 = vunpack.c.l.bf16 %v270
  %v272 = vld [vmem:[%s2] sm:$0xf]
  %v273 = vld [vmem:[%s2 + $0x4] sm:$0xf]
  %v274 = vld [vmem:[%s2 + $0x8] sm:$0xf]
  %v275 = vld [vmem:[%s2 + $0xc] sm:$0xf]
  %276 = vrot.lane.b32.xlu0 %v260, 32
  %v277 = vpop.permute.xlu0 %276
  %v282 = vunpack.c.l.b16 %v272
  %v283 = vunpack.c.l.b16 %v273
  %v284 = vunpack.c.l.b16 %v274
  %v285 = vunpack.c.l.b16 %v275
  %v286 = vpack.c.b16 %v283, %v282
  %v287 = vpack.c.b16 %v285, %v284
  %v291 = vsel %vm186, %v277, 0
  %293 = vmatprep.subr.bf16.mxu0 0
  %294 = vmatpush1.bf16.msra.mxu0 %v286
  %295 = vmatprep.subr.bf16.mxu0 0
  %296 = vmatpush1.bf16.msra.mxu0 %v287
  %297 = vmatprep.subr.bf16.mxu0 0
  %298 = vmatpush1.bf16.msra.mxu0 0
  %299 = vmatprep.subr.bf16.mxu0 0
  %300 = vmatpush1.bf16.msra.mxu0 0
  %301 = vmatprep.subr.bf16.mxu0 0
  %302 = vmatpush1.bf16.msra.mxu0 0
  %303 = vmatprep.subr.bf16.mxu0 0
  %304 = vmatpush1.bf16.msra.mxu0 0
  %305 = vmatprep.subr.bf16.mxu0 0
  %306 = vmatpush1.bf16.msra.mxu0 0
  %307 = vmatprep.subr.bf16.mxu0 0
  %308 = vmatpush1.bf16.msra.mxu0 0
  %309 = vmatprep.subr.bf16.mxu0 0
  %310 = vmatpush1.bf16.msra.mxu0 0
  %311 = vmatprep.subr.bf16.mxu0 0
  %312 = vmatpush1.bf16.msra.mxu0 0
  %313 = vmatprep.subr.bf16.mxu0 0
  %314 = vmatpush1.bf16.msra.mxu0 0
  %315 = vmatprep.subr.bf16.mxu0 0
  %316 = vmatpush1.bf16.msra.mxu0 0
  %317 = vmatprep.subr.bf16.mxu0 0
  %318 = vmatpush1.bf16.msra.mxu0 0
  %319 = vmatprep.subr.bf16.mxu0 0
  %320 = vmatpush1.bf16.msra.mxu0 0
  %321 = vmatprep.subr.bf16.mxu0 0
  %322 = vmatpush1.bf16.msra.mxu0 0
  %323 = vmatprep.subr.bf16.mxu0 0
  %324 = vmatpush1.bf16.msra.mxu0 0
  %325 = vmatprep.mubr.bf16.mxu0 0
  %326 = vmatmul.mubr.bf16.gmra.mrb[0].mxu0 %v291
  %v327 = vpop.f32.mrb[0].mxu0
  %v328 = vadd.f32 0.0, %v327
  %v329 = vpop.f32.mrb[0].mxu0
  %v330 = vpop.f32.mrb[0].mxu0
  %v331 = vpop.f32.mrb[0].mxu0
  %332 = vdwg.mxu0
  %v333 = vadd.f32 %v271, %v328
  %v334 = vxor.u32 %v333, 2147483648
  %v335 = vmul.f32 %v334, 1.442695
  %v336 = vpow.pop %v335
  %v337 = vadd.f32 %v336, 1.0
  %v338 = vrcp.pop %v337
  %v339 = vmul.f32 1.0, %v338
  %v340 = vmul.f32 %v339, 2.0
  %v341 = vsub.f32 %v340, 1.0
  %v342 = vmul.f32 %v339, %v253
  %344 = vrot.lane.b32.xlu0 %v341, 64
  %v345 = vpop.permute.xlu0 %344
  %v347 = vmul.f32 %v339, %v345
  %349 = vrot.lane.b32.xlu0 %v347, 32
  %v350 = vpop.permute.xlu0 %349
  %v352 = vadd.f32 %v342, %v350
  %v353 = vtanh.pop %v352
  %355 = vrot.lane.b32.xlu0 %v353, 64
  %v356 = vpop.permute.xlu0 %355
  %v358 = vmul.f32 %v339, %v356
  %v359 = vpack.c.bf16 %v358, %v358
  %v361 = vunpack.c.l.b16 %v359
  %v362 = vpack.c.b16 %v361, %v361
  %363 = vrot.lane.b32.xlu0 %v362, 32
  %v364 = vpop.permute.xlu0 %363
  %s366 = scalar_lea.vmem %s4, 4
  %367 = vst.msk [vmem:[%s366] sm:$0xf] %vm267, %v364
  %s368 = scalar_lea.vmem [#allocation4], 8
  %v369 = vld [vmem:[%s368] sm:$0xf]
  %v370 = vunpack.c.l.bf16 %v369
  %v371 = vld [vmem:[%s2] sm:$0xf]
  %v372 = vld [vmem:[%s2 + $0x4] sm:$0xf]
  %v373 = vld [vmem:[%s2 + $0x8] sm:$0xf]
  %v374 = vld [vmem:[%s2 + $0xc] sm:$0xf]
  %375 = vrot.lane.b32.xlu0 %v359, 32
  %v376 = vpop.permute.xlu0 %375
  %v381 = vunpack.c.l.b16 %v371
  %v382 = vunpack.c.l.b16 %v372
  %v383 = vunpack.c.l.b16 %v373
  %v384 = vunpack.c.l.b16 %v374
  %v385 = vpack.c.b16 %v382, %v381
  %v386 = vpack.c.b16 %v384, %v383
  %v390 = vsel %vm186, %v376, 0
  %392 = vmatprep.subr.bf16.mxu0 0
  %393 = vmatpush1.bf16.msra.mxu0 %v385
  %394 = vmatprep.subr.bf16.mxu0 0
  %395 = vmatpush1.bf16.msra.mxu0 %v386
  %396 = vmatprep.subr.bf16.mxu0 0
  %397 = vmatpush1.bf16.msra.mxu0 0
  %398 = vmatprep.subr.bf16.mxu0 0
  %399 = vmatpush1.bf16.msra.mxu0 0
  %400 = vmatprep.subr.bf16.mxu0 0
  %401 = vmatpush1.bf16.msra.mxu0 0
  %402 = vmatprep.subr.bf16.mxu0 0
  %403 = vmatpush1.bf16.msra.mxu0 0
  %404 = vmatprep.subr.bf16.mxu0 0
  %405 = vmatpush1.bf16.msra.mxu0 0
  %406 = vmatprep.subr.bf16.mxu0 0
  %407 = vmatpush1.bf16.msra.mxu0 0
  %408 = vmatprep.subr.bf16.mxu0 0
  %409 = vmatpush1.bf16.msra.mxu0 0
  %410 = vmatprep.subr.bf16.mxu0 0
  %411 = vmatpush1.bf16.msra.mxu0 0
  %412 = vmatprep.subr.bf16.mxu0 0
  %413 = vmatpush1.bf16.msra.mxu0 0
  %414 = vmatprep.subr.bf16.mxu0 0
  %415 = vmatpush1.bf16.msra.mxu0 0
  %416 = vmatprep.subr.bf16.mxu0 0
  %417 = vmatpush1.bf16.msra.mxu0 0
  %418 = vmatprep.subr.bf16.mxu0 0
  %419 = vmatpush1.bf16.msra.mxu0 0
  %420 = vmatprep.subr.bf16.mxu0 0
  %421 = vmatpush1.bf16.msra.mxu0 0
  %422 = vmatprep.subr.bf16.mxu0 0
  %423 = vmatpush1.bf16.msra.mxu0 0
  %424 = vmatprep.mubr.bf16.mxu0 0
  %425 = vmatmul.mubr.bf16.gmra.mrb[0].mxu0 %v390
  %v426 = vpop.f32.mrb[0].mxu0
  %v427 = vadd.f32 0.0, %v426
  %v428 = vpop.f32.mrb[0].mxu0
  %v429 = vpop.f32.mrb[0].mxu0
  %v430 = vpop.f32.mrb[0].mxu0
  %431 = vdwg.mxu0
  %v432 = vadd.f32 %v370, %v427
  %v433 = vxor.u32 %v432, 2147483648
  %v434 = vmul.f32 %v433, 1.442695
  %v435 = vpow.pop %v434
  %v436 = vadd.f32 %v435, 1.0
  %v437 = vrcp.pop %v436
  %v438 = vmul.f32 1.0, %v437
  %v439 = vmul.f32 %v438, 2.0
  %v440 = vsub.f32 %v439, 1.0
  %v441 = vmul.f32 %v438, %v352
  %443 = vrot.lane.b32.xlu0 %v440, 64
  %v444 = vpop.permute.xlu0 %443
  %v446 = vmul.f32 %v438, %v444
  %448 = vrot.lane.b32.xlu0 %v446, 32
  %v449 = vpop.permute.xlu0 %448
  %v451 = vadd.f32 %v441, %v449
  %v452 = vtanh.pop %v451
  %454 = vrot.lane.b32.xlu0 %v452, 64
  %v455 = vpop.permute.xlu0 %454
  %v457 = vmul.f32 %v438, %v455
  %v458 = vpack.c.bf16 %v457, %v457
  %v460 = vunpack.c.l.b16 %v458
  %v461 = vpack.c.b16 %v460, %v460
  %462 = vrot.lane.b32.xlu0 %v461, 32
  %v463 = vpop.permute.xlu0 %462
  %s465 = scalar_lea.vmem %s4, 8
  %466 = vst.msk [vmem:[%s465] sm:$0xf] %vm267, %v463
  %s467 = scalar_lea.vmem [#allocation4], 12
  %v468 = vld [vmem:[%s467] sm:$0xf]
  %v469 = vunpack.c.l.bf16 %v468
  %v470 = vld [vmem:[%s2] sm:$0xf]
  %v471 = vld [vmem:[%s2 + $0x4] sm:$0xf]
  %v472 = vld [vmem:[%s2 + $0x8] sm:$0xf]
  %v473 = vld [vmem:[%s2 + $0xc] sm:$0xf]
  %474 = vrot.lane.b32.xlu0 %v458, 32
  %v475 = vpop.permute.xlu0 %474
  %v480 = vunpack.c.l.b16 %v470
  %v481 = vunpack.c.l.b16 %v471
  %v482 = vunpack.c.l.b16 %v472
  %v483 = vunpack.c.l.b16 %v473
  %v484 = vpack.c.b16 %v481, %v480
  %v485 = vpack.c.b16 %v483, %v482
  %v489 = vsel %vm186, %v475, 0
  %491 = vmatprep.subr.bf16.mxu0 0
  %492 = vmatpush1.bf16.msra.mxu0 %v484
  %493 = vmatprep.subr.bf16.mxu0 0
  %494 = vmatpush1.bf16.msra.mxu0 %v485
  %495 = vmatprep.subr.bf16.mxu0 0
  %496 = vmatpush1.bf16.msra.mxu0 0
  %497 = vmatprep.subr.bf16.mxu0 0
  %498 = vmatpush1.bf16.msra.mxu0 0
  %499 = vmatprep.subr.bf16.mxu0 0
  %500 = vmatpush1.bf16.msra.mxu0 0
  %501 = vmatprep.subr.bf16.mxu0 0
  %502 = vmatpush1.bf16.msra.mxu0 0
  %503 = vmatprep.subr.bf16.mxu0 0
  %504 = vmatpush1.bf16.msra.mxu0 0
  %505 = vmatprep.subr.bf16.mxu0 0
  %506 = vmatpush1.bf16.msra.mxu0 0
  %507 = vmatprep.subr.bf16.mxu0 0
  %508 = vmatpush1.bf16.msra.mxu0 0
  %509 = vmatprep.subr.bf16.mxu0 0
  %510 = vmatpush1.bf16.msra.mxu0 0
  %511 = vmatprep.subr.bf16.mxu0 0
  %512 = vmatpush1.bf16.msra.mxu0 0
  %513 = vmatprep.subr.bf16.mxu0 0
  %514 = vmatpush1.bf16.msra.mxu0 0
  %515 = vmatprep.subr.bf16.mxu0 0
  %516 = vmatpush1.bf16.msra.mxu0 0
  %517 = vmatprep.subr.bf16.mxu0 0
  %518 = vmatpush1.bf16.msra.mxu0 0
  %519 = vmatprep.subr.bf16.mxu0 0
  %520 = vmatpush1.bf16.msra.mxu0 0
  %521 = vmatprep.subr.bf16.mxu0 0
  %522 = vmatpush1.bf16.msra.mxu0 0
  %523 = vmatprep.mubr.bf16.mxu0 0
  %524 = vmatmul.mubr.bf16.gmra.mrb[0].mxu0 %v489
  %v525 = vpop.f32.mrb[0].mxu0
  %v526 = vadd.f32 0.0, %v525
  %v527 = vpop.f32.mrb[0].mxu0
  %v528 = vpop.f32.mrb[0].mxu0
  %v529 = vpop.f32.mrb[0].mxu0
  %530 = vdwg.mxu0
  %v531 = vadd.f32 %v469, %v526
  %v532 = vxor.u32 %v531, 2147483648
  %v533 = vmul.f32 %v532, 1.442695
  %v534 = vpow.pop %v533
  %v535 = vadd.f32 %v534, 1.0
  %v536 = vrcp.pop %v535
  %v537 = vmul.f32 1.0, %v536
  %v538 = vmul.f32 %v537, 2.0
  %v539 = vsub.f32 %v538, 1.0
  %v540 = vmul.f32 %v537, %v451
  %542 = vrot.lane.b32.xlu0 %v539, 64
  %v543 = vpop.permute.xlu0 %542
  %v545 = vmul.f32 %v537, %v543
  %547 = vrot.lane.b32.xlu0 %v545, 32
  %v548 = vpop.permute.xlu0 %547
  %v550 = vadd.f32 %v540, %v548
  %v551 = vtanh.pop %v550
  %553 = vrot.lane.b32.xlu0 %v551, 64
  %v554 = vpop.permute.xlu0 %553
  %v556 = vmul.f32 %v537, %v554
  %v557 = vpack.c.bf16 %v556, %v556
  %v559 = vunpack.c.l.b16 %v557
  %v560 = vpack.c.b16 %v559, %v559
  %561 = vrot.lane.b32.xlu0 %v560, 32
  %v562 = vpop.permute.xlu0 %561
  %s564 = scalar_lea.vmem %s4, 12
  %565 = vst.msk [vmem:[%s564] sm:$0xf] %vm267, %v562
  %s566 = scalar_lea.vmem [#allocation4], 16
  %v567 = vld [vmem:[%s566] sm:$0xf]
  %v568 = vunpack.c.l.bf16 %v567
  %v569 = vld [vmem:[%s2] sm:$0xf]
  %v570 = vld [vmem:[%s2 + $0x4] sm:$0xf]
  %v571 = vld [vmem:[%s2 + $0x8] sm:$0xf]
  %v572 = vld [vmem:[%s2 + $0xc] sm:$0xf]
  %573 = vrot.lane.b32.xlu0 %v557, 32
  %v574 = vpop.permute.xlu0 %573
  %v579 = vunpack.c.l.b16 %v569
  %v580 = vunpack.c.l.b16 %v570
  %v581 = vunpack.c.l.b16 %v571
  %v582 = vunpack.c.l.b16 %v572
  %v583 = vpack.c.b16 %v580, %v579
  %v584 = vpack.c.b16 %v582, %v581
  %v588 = vsel %vm186, %v574, 0
  %590 = vmatprep.subr.bf16.mxu0 0
  %591 = vmatpush1.bf16.msra.mxu0 %v583
  %592 = vmatprep.subr.bf16.mxu0 0
  %593 = vmatpush1.bf16.msra.mxu0 %v584
  %594 = vmatprep.subr.bf16.mxu0 0
  %595 = vmatpush1.bf16.msra.mxu0 0
  %596 = vmatprep.subr.bf16.mxu0 0
  %597 = vmatpush1.bf16.msra.mxu0 0
  %598 = vmatprep.subr.bf16.mxu0 0
  %599 = vmatpush1.bf16.msra.mxu0 0
  %600 = vmatprep.subr.bf16.mxu0 0
  %601 = vmatpush1.bf16.msra.mxu0 0
  %602 = vmatprep.subr.bf16.mxu0 0
  %603 = vmatpush1.bf16.msra.mxu0 0
  %604 = vmatprep.subr.bf16.mxu0 0
  %605 = vmatpush1.bf16.msra.mxu0 0
  %606 = vmatprep.subr.bf16.mxu0 0
  %607 = vmatpush1.bf16.msra.mxu0 0
  %608 = vmatprep.subr.bf16.mxu0 0
  %609 = vmatpush1.bf16.msra.mxu0 0
  %610 = vmatprep.subr.bf16.mxu0 0
  %611 = vmatpush1.bf16.msra.mxu0 0
  %612 = vmatprep.subr.bf16.mxu0 0
  %613 = vmatpush1.bf16.msra.mxu0 0
  %614 = vmatprep.subr.bf16.mxu0 0
  %615 = vmatpush1.bf16.msra.mxu0 0
  %616 = vmatprep.subr.bf16.mxu0 0
  %617 = vmatpush1.bf16.msra.mxu0 0
  %618 = vmatprep.subr.bf16.mxu0 0
  %619 = vmatpush1.bf16.msra.mxu0 0
  %620 = vmatprep.subr.bf16.mxu0 0
  %621 = vmatpush1.bf16.msra.mxu0 0
  %622 = vmatprep.mubr.bf16.mxu0 0
  %623 = vmatmul.mubr.bf16.gmra.mrb[0].mxu0 %v588
  %v624 = vpop.f32.mrb[0].mxu0
  %v625 = vadd.f32 0.0, %v624
  %v626 = vpop.f32.mrb[0].mxu0
  %v627 = vpop.f32.mrb[0].mxu0
  %v628 = vpop.f32.mrb[0].mxu0
  %629 = vdwg.mxu0
  %v630 = vadd.f32 %v568, %v625
  %v631 = vxor.u32 %v630, 2147483648
  %v632 = vmul.f32 %v631, 1.442695
  %v633 = vpow.pop %v632
  %v634 = vadd.f32 %v633, 1.0
  %v635 = vrcp.pop %v634
  %v636 = vmul.f32 1.0, %v635
  %v637 = vmul.f32 %v636, 2.0
  %v638 = vsub.f32 %v637, 1.0
  %v639 = vmul.f32 %v636, %v550
  %641 = vrot.lane.b32.xlu0 %v638, 64
  %v642 = vpop.permute.xlu0 %641
  %v644 = vmul.f32 %v636, %v642
  %646 = vrot.lane.b32.xlu0 %v644, 32
  %v647 = vpop.permute.xlu0 %646
  %v649 = vadd.f32 %v639, %v647
  %v650 = vtanh.pop %v649
  %652 = vrot.lane.b32.xlu0 %v650, 64
  %v653 = vpop.permute.xlu0 %652
  %v655 = vmul.f32 %v636, %v653
  %v656 = vpack.c.bf16 %v655, %v655
  %v658 = vunpack.c.l.b16 %v656
  %v659 = vpack.c.b16 %v658, %v658
  %660 = vrot.lane.b32.xlu0 %v659, 32
  %v661 = vpop.permute.xlu0 %660
  %s663 = scalar_lea.vmem %s4, 16
  %664 = vst.msk [vmem:[%s663] sm:$0xf] %vm267, %v661
  %s665 = scalar_lea.vmem [#allocation4], 20
  %v666 = vld [vmem:[%s665] sm:$0xf]
  %v667 = vunpack.c.l.bf16 %v666
  %v668 = vld [vmem:[%s2] sm:$0xf]
  %v669 = vld [vmem:[%s2 + $0x4] sm:$0xf]
  %v670 = vld [vmem:[%s2 + $0x8] sm:$0xf]
  %v671 = vld [vmem:[%s2 + $0xc] sm:$0xf]
  %672 = vrot.lane.b32.xlu0 %v656, 32
  %v673 = vpop.permute.xlu0 %672
  %v678 = vunpack.c.l.b16 %v668
  %v679 = vunpack.c.l.b16 %v669
  %v680 = vunpack.c.l.b16 %v670
  %v681 = vunpack.c.l.b16 %v671
  %v682 = vpack.c.b16 %v679, %v678
  %v683 = vpack.c.b16 %v681, %v680
  %v687 = vsel %vm186, %v673, 0
  %689 = vmatprep.subr.bf16.mxu0 0
  %690 = vmatpush1.bf16.msra.mxu0 %v682
  %691 = vmatprep.subr.bf16.mxu0 0
  %692 = vmatpush1.bf16.msra.mxu0 %v683
  %693 = vmatprep.subr.bf16.mxu0 0
  %694 = vmatpush1.bf16.msra.mxu0 0
  %695 = vmatprep.subr.bf16.mxu0 0
  %696 = vmatpush1.bf16.msra.mxu0 0
  %697 = vmatprep.subr.bf16.mxu0 0
  %698 = vmatpush1.bf16.msra.mxu0 0
  %699 = vmatprep.subr.bf16.mxu0 0
  %700 = vmatpush1.bf16.msra.mxu0 0
  %701 = vmatprep.subr.bf16.mxu0 0
  %702 = vmatpush1.bf16.msra.mxu0 0
  %703 = vmatprep.subr.bf16.mxu0 0
  %704 = vmatpush1.bf16.msra.mxu0 0
  %705 = vmatprep.subr.bf16.mxu0 0
  %706 = vmatpush1.bf16.msra.mxu0 0
  %707 = vmatprep.subr.bf16.mxu0 0
  %708 = vmatpush1.bf16.msra.mxu0 0
  %709 = vmatprep.subr.bf16.mxu0 0
  %710 = vmatpush1.bf16.msra.mxu0 0
  %711 = vmatprep.subr.bf16.mxu0 0
  %712 = vmatpush1.bf16.msra.mxu0 0
  %713 = vmatprep.subr.bf16.mxu0 0
  %714 = vmatpush1.bf16.msra.mxu0 0
  %715 = vmatprep.subr.bf16.mxu0 0
  %716 = vmatpush1.bf16.msra.mxu0 0
  %717 = vmatprep.subr.bf16.mxu0 0
  %718 = vmatpush1.bf16.msra.mxu0 0
  %719 = vmatprep.subr.bf16.mxu0 0
  %720 = vmatpush1.bf16.msra.mxu0 0
  %721 = vmatprep.mubr.bf16.mxu0 0
  %722 = vmatmul.mubr.bf16.gmra.mrb[0].mxu0 %v687
  %v723 = vpop.f32.mrb[0].mxu0
  %v724 = vadd.f32 0.0, %v723
  %v725 = vpop.f32.mrb[0].mxu0
  %v726 = vpop.f32.mrb[0].mxu0
  %v727 = vpop.f32.mrb[0].mxu0
  %728 = vdwg.mxu0
  %v729 = vadd.f32 %v667, %v724
  %v730 = vxor.u32 %v729, 2147483648
  %v731 = vmul.f32 %v730, 1.442695
  %v732 = vpow.pop %v731
  %v733 = vadd.f32 %v732, 1.0
  %v734 = vrcp.pop %v733
  %v735 = vmul.f32 1.0, %v734
  %v736 = vmul.f32 %v735, 2.0
  %v737 = vsub.f32 %v736, 1.0
  %v738 = vmul.f32 %v735, %v649
  %740 = vrot.lane.b32.xlu0 %v737, 64
  %v741 = vpop.permute.xlu0 %740
  %v743 = vmul.f32 %v735, %v741
  %745 = vrot.lane.b32.xlu0 %v743, 32
  %v746 = vpop.permute.xlu0 %745
  %v748 = vadd.f32 %v738, %v746
  %v749 = vtanh.pop %v748
  %751 = vrot.lane.b32.xlu0 %v749, 64
  %v752 = vpop.permute.xlu0 %751
  %v754 = vmul.f32 %v735, %v752
  %v755 = vpack.c.bf16 %v754, %v754
  %v757 = vunpack.c.l.b16 %v755
  %v758 = vpack.c.b16 %v757, %v757
  %759 = vrot.lane.b32.xlu0 %v758, 32
  %v760 = vpop.permute.xlu0 %759
  %s762 = scalar_lea.vmem %s4, 20
  %763 = vst.msk [vmem:[%s762] sm:$0xf] %vm267, %v760
  %s764 = scalar_lea.vmem [#allocation4], 24
  %v765 = vld [vmem:[%s764] sm:$0xf]
  %v766 = vunpack.c.l.bf16 %v765
  %v767 = vld [vmem:[%s2] sm:$0xf]
  %v768 = vld [vmem:[%s2 + $0x4] sm:$0xf]
  %v769 = vld [vmem:[%s2 + $0x8] sm:$0xf]
  %v770 = vld [vmem:[%s2 + $0xc] sm:$0xf]
  %771 = vrot.lane.b32.xlu0 %v755, 32
  %v772 = vpop.permute.xlu0 %771
  %v777 = vunpack.c.l.b16 %v767
  %v778 = vunpack.c.l.b16 %v768
  %v779 = vunpack.c.l.b16 %v769
  %v780 = vunpack.c.l.b16 %v770
  %v781 = vpack.c.b16 %v778, %v777
  %v782 = vpack.c.b16 %v780, %v779
  %v786 = vsel %vm186, %v772, 0
  %788 = vmatprep.subr.bf16.mxu0 0
  %789 = vmatpush1.bf16.msra.mxu0 %v781
  %790 = vmatprep.subr.bf16.mxu0 0
  %791 = vmatpush1.bf16.msra.mxu0 %v782
  %792 = vmatprep.subr.bf16.mxu0 0
  %793 = vmatpush1.bf16.msra.mxu0 0
  %794 = vmatprep.subr.bf16.mxu0 0
  %795 = vmatpush1.bf16.msra.mxu0 0
  %796 = vmatprep.subr.bf16.mxu0 0
  %797 = vmatpush1.bf16.msra.mxu0 0
  %798 = vmatprep.subr.bf16.mxu0 0
  %799 = vmatpush1.bf16.msra.mxu0 0
  %800 = vmatprep.subr.bf16.mxu0 0
  %801 = vmatpush1.bf16.msra.mxu0 0
  %802 = vmatprep.subr.bf16.mxu0 0
  %803 = vmatpush1.bf16.msra.mxu0 0
  %804 = vmatprep.subr.bf16.mxu0 0
  %805 = vmatpush1.bf16.msra.mxu0 0
  %806 = vmatprep.subr.bf16.mxu0 0
  %807 = vmatpush1.bf16.msra.mxu0 0
  %808 = vmatprep.subr.bf16.mxu0 0
  %809 = vmatpush1.bf16.msra.mxu0 0
  %810 = vmatprep.subr.bf16.mxu0 0
  %811 = vmatpush1.bf16.msra.mxu0 0
  %812 = vmatprep.subr.bf16.mxu0 0
  %813 = vmatpush1.bf16.msra.mxu0 0
  %814 = vmatprep.subr.bf16.mxu0 0
  %815 = vmatpush1.bf16.msra.mxu0 0
  %816 = vmatprep.subr.bf16.mxu0 0
  %817 = vmatpush1.bf16.msra.mxu0 0
  %818 = vmatprep.subr.bf16.mxu0 0
  %819 = vmatpush1.bf16.msra.mxu0 0
  %820 = vmatprep.mubr.bf16.mxu0 0
  %821 = vmatmul.mubr.bf16.gmra.mrb[0].mxu0 %v786
  %v822 = vpop.f32.mrb[0].mxu0
  %v823 = vadd.f32 0.0, %v822
  %v824 = vpop.f32.mrb[0].mxu0
  %v825 = vpop.f32.mrb[0].mxu0
  %v826 = vpop.f32.mrb[0].mxu0
  %827 = vdwg.mxu0
  %v828 = vadd.f32 %v766, %v823
  %v829 = vxor.u32 %v828, 2147483648
  %v830 = vmul.f32 %v829, 1.442695
  %v831 = vpow.pop %v830
  %v832 = vadd.f32 %v831, 1.0
  %v833 = vrcp.pop %v832
  %v834 = vmul.f32 1.0, %v833
  %v835 = vmul.f32 %v834, 2.0
  %v836 = vsub.f32 %v835, 1.0
  %v837 = vmul.f32 %v834, %v748
  %839 = vrot.lane.b32.xlu0 %v836, 64
  %v840 = vpop.permute.xlu0 %839
  %v842 = vmul.f32 %v834, %v840
  %844 = vrot.lane.b32.xlu0 %v842, 32
  %v845 = vpop.permute.xlu0 %844
  %v847 = vadd.f32 %v837, %v845
  %v848 = vtanh.pop %v847
  %850 = vrot.lane.b32.xlu0 %v848, 64
  %v851 = vpop.permute.xlu0 %850
  %v853 = vmul.f32 %v834, %v851
  %v854 = vpack.c.bf16 %v853, %v853
  %v856 = vunpack.c.l.b16 %v854
  %v857 = vpack.c.b16 %v856, %v856
  %858 = vrot.lane.b32.xlu0 %v857, 32
  %v859 = vpop.permute.xlu0 %858
  %s861 = scalar_lea.vmem %s4, 24
  %862 = vst.msk [vmem:[%s861] sm:$0xf] %vm267, %v859
  %s863 = scalar_lea.vmem [#allocation4], 28
  %v864 = vld [vmem:[%s863] sm:$0xf]
  %v865 = vunpack.c.l.bf16 %v864
  %v866 = vld [vmem:[%s2] sm:$0xf]
  %v867 = vld [vmem:[%s2 + $0x4] sm:$0xf]
  %v868 = vld [vmem:[%s2 + $0x8] sm:$0xf]
  %v869 = vld [vmem:[%s2 + $0xc] sm:$0xf]
  %870 = vrot.lane.b32.xlu0 %v854, 32
  %v871 = vpop.permute.xlu0 %870
  %v876 = vunpack.c.l.b16 %v866
  %v877 = vunpack.c.l.b16 %v867
  %v878 = vunpack.c.l.b16 %v868
  %v879 = vunpack.c.l.b16 %v869
  %v880 = vpack.c.b16 %v877, %v876
  %v881 = vpack.c.b16 %v879, %v878
  %v885 = vsel %vm186, %v871, 0
  %887 = vmatprep.subr.bf16.mxu0 0
  %888 = vmatpush1.bf16.msra.mxu0 %v880
  %889 = vmatprep.subr.bf16.mxu0 0
  %890 = vmatpush1.bf16.msra.mxu0 %v881
  %891 = vmatprep.subr.bf16.mxu0 0
  %892 = vmatpush1.bf16.msra.mxu0 0
  %893 = vmatprep.subr.bf16.mxu0 0
  %894 = vmatpush1.bf16.msra.mxu0 0
  %895 = vmatprep.subr.bf16.mxu0 0
  %896 = vmatpush1.bf16.msra.mxu0 0
  %897 = vmatprep.subr.bf16.mxu0 0
  %898 = vmatpush1.bf16.msra.mxu0 0
  %899 = vmatprep.subr.bf16.mxu0 0
  %900 = vmatpush1.bf16.msra.mxu0 0
  %901 = vmatprep.subr.bf16.mxu0 0
  %902 = vmatpush1.bf16.msra.mxu0 0
  %903 = vmatprep.subr.bf16.mxu0 0
  %904 = vmatpush1.bf16.msra.mxu0 0
  %905 = vmatprep.subr.bf16.mxu0 0
  %906 = vmatpush1.bf16.msra.mxu0 0
  %907 = vmatprep.subr.bf16.mxu0 0
  %908 = vmatpush1.bf16.msra.mxu0 0
  %909 = vmatprep.subr.bf16.mxu0 0
  %910 = vmatpush1.bf16.msra.mxu0 0
  %911 = vmatprep.subr.bf16.mxu0 0
  %912 = vmatpush1.bf16.msra.mxu0 0
  %913 = vmatprep.subr.bf16.mxu0 0
  %914 = vmatpush1.bf16.msra.mxu0 0
  %915 = vmatprep.subr.bf16.mxu0 0
  %916 = vmatpush1.bf16.msra.mxu0 0
  %917 = vmatprep.subr.bf16.mxu0 0
  %918 = vmatpush1.bf16.msra.mxu0 0
  %919 = vmatprep.mubr.bf16.mxu0 0
  %920 = vmatmul.mubr.bf16.gmra.mrb[0].mxu0 %v885
  %v921 = vpop.f32.mrb[0].mxu0
  %v922 = vadd.f32 0.0, %v921
  %v923 = vpop.f32.mrb[0].mxu0
  %v924 = vpop.f32.mrb[0].mxu0
  %v925 = vpop.f32.mrb[0].mxu0
  %926 = vdwg.mxu0
  %v927 = vadd.f32 %v865, %v922
  %v928 = vxor.u32 %v927, 2147483648
  %v929 = vmul.f32 %v928, 1.442695
  %v930 = vpow.pop %v929
  %v931 = vadd.f32 %v930, 1.0
  %v932 = vrcp.pop %v931
  %v933 = vmul.f32 1.0, %v932
  %v934 = vmul.f32 %v933, 2.0
  %v935 = vsub.f32 %v934, 1.0
  %v936 = vmul.f32 %v933, %v847
  %938 = vrot.lane.b32.xlu0 %v935, 64
  %v939 = vpop.permute.xlu0 %938
  %v941 = vmul.f32 %v933, %v939
  %943 = vrot.lane.b32.xlu0 %v941, 32
  %v944 = vpop.permute.xlu0 %943
  %v946 = vadd.f32 %v936, %v944
  %v947 = vtanh.pop %v946
  %949 = vrot.lane.b32.xlu0 %v947, 64
  %v950 = vpop.permute.xlu0 %949
  %v952 = vmul.f32 %v933, %v950
  %v953 = vpack.c.bf16 %v952, %v952
  %v955 = vunpack.c.l.b16 %v953
  %v956 = vpack.c.b16 %v955, %v955
  %957 = vrot.lane.b32.xlu0 %v956, 32
  %v958 = vpop.permute.xlu0 %957
  %s960 = scalar_lea.vmem %s4, 28
  %961 = vst.msk [vmem:[%s960] sm:$0xf] %vm267, %v958
  %963 = vrot.lane.b32.xlu0 %v952, 32
  %v964 = vpop.permute.xlu0 %963
  %966 = vst.msk [vmem:[#allocation2] sm:$0xff] %vm186, %v964
  %968 = vrot.lane.b32.xlu0 %v946, 96
  %v969 = vpop.permute.xlu0 %968
  %971 = vst.msk [vmem:[#allocation3] sm:$0xff] %vm186, %v969
  %972 = vst.msk [vmem:[%s5] sm:$0xff] %vm186, %v964
  %973 = vst.msk [vmem:[%s6] sm:$0xff] %vm186, %v969
  // Predicated region
  $region22: #{lstm_torch_forward.2} parent=0 // pred_check
    _
  $region23: #{lstm_torch_forward.2} parent=0 // pred_check_branch
    %975 = sbr.rel (0) target = $region25
  $region24: #{lstm_torch_forward.2} parent=0 // pred_region
    _
  $region25: #{lstm_torch_forward.2} parent=0 // pred_fallthru
    _
  // Predicated region
  $region26: #{lstm_torch_forward.2} parent=0 // pred_check
    _
  $region27: #{lstm_torch_forward.2} parent=0 // pred_check_branch
    %977 = sbr.rel (0) target = $region29
  $region28: #{lstm_torch_forward.2} parent=0 // pred_region
    _
  $region29: #{lstm_torch_forward.2} parent=0 // pred_fallthru
    _
  // Predicated region
  $region30: #{lstm_torch_forward.2} parent=0 // pred_check
    _
  $region31: #{lstm_torch_forward.2} parent=0 // pred_check_branch
    %979 = sbr.rel (0) target = $region33
  $region32: #{lstm_torch_forward.2} parent=0 // pred_region
    _
  $region33: #{lstm_torch_forward.2} parent=0 // pred_fallthru
    _
  // Predicated region
  $region34: #{lstm_torch_forward.2} parent=0 // pred_check
    _
  $region35: #{lstm_torch_forward.2} parent=0 // pred_check_branch
    %981 = sbr.rel (0) target = $region37
  $region36: #{lstm_torch_forward.2} parent=0 // pred_region
    _
  $region37: #{lstm_torch_forward.2} parent=0 // pred_fallthru
    _
  // Predicated region
  $region38: #{lstm_torch_forward.2} parent=0 // pred_check
    _
  $region39: #{lstm_torch_forward.2} parent=0 // pred_check_branch
    %983 = sbr.rel (0) target = $region41
  $region40: #{lstm_torch_forward.2} parent=0 // pred_region
    _
  $region41: #{lstm_torch_forward.2} parent=0 // pred_fallthru
    _
  // Predicated region
  $region42: #{lstm_torch_forward.2} parent=0 // pred_check
    _
  $region43: #{lstm_torch_forward.2} parent=0 // pred_check_branch
    %985 = sbr.rel (0) target = $region45
  $region44: #{lstm_torch_forward.2} parent=0 // pred_region
    _
  $region45: #{lstm_torch_forward.2} parent=0 // pred_fallthru
    _

</llo_original>
